<compile_context>
chip_gen: v5e
topology: v5e:2x2
jax: 0.10.0
libtpu: 0.0.40
codegen_flags: <defaults>
</compile_context>

<pallas_src>
import math
import functools

import jax
import jax.numpy as jnp
import numpy as np
from jax import lax
from jax.experimental import pallas as pl
from jax.experimental.pallas import tpu as pltpu


# ----------------------------- kernel helpers -------------------------------

def _layernorm(x, w, b, eps=1e-5):
    # Matches torch.nn.LayerNorm (biased variance, eps inside rsqrt).
    mu = jnp.mean(x, axis=-1, keepdims=True)
    var = jnp.mean((x - mu) ** 2, axis=-1, keepdims=True)
    xhat = (x - mu) * lax.rsqrt(var + eps)
    return xhat * w + b


def _gelu_tanh(x):
    # Matches F.gelu(..., approximate='tanh').
    c = math.sqrt(2.0 / math.pi)
    return 0.5 * x * (1.0 + jnp.tanh(c * (x + 0.044715 * x * x * x)))


# ------------------------------- kernels ------------------------------------

def gpt2_blocks_kernel(n_head,
                       x_ref, ln1w_ref, ln1b_ref,
                       wqkv_ref, bqkv_ref, wproj_ref, bproj_ref,
                       ln2w_ref, ln2b_ref,
                       wfc_ref, bfc_ref, wfc2_ref, bfc2_ref,
                       out_ref):
    """Grid (B, L).  One step = one transformer Block applied to one sequence.

    out_ref is the residual stream for sequence b; it stays resident in VMEM
    across the (arbitrary) layer axis and is only flushed to HBM when b changes.
    """
    T, C = x_ref.shape
    hd = C // n_head
    layer = pl.program_id(1)

    @pl.when(layer == 0)
    def _():
        out_ref[...] = x_ref[...]          # load residual stream once per seq

    x = out_ref[...]                        # (T, C)

    # ----- causal self attention branch -----
    h = _layernorm(x, ln1w_ref[...], ln1b_ref[...])
    qkv = jnp.dot(h, wqkv_ref[...],
                  preferred_element_type=jnp.float32) + bqkv_ref[...]   # (T, 3C)

    # head-batched q/k/v: (H, T, hd)
    q = qkv[:, 0 * C:1 * C].reshape(T, n_head, hd).transpose(1, 0, 2)
    k = qkv[:, 1 * C:2 * C].reshape(T, n_head, hd).transpose(1, 0, 2)
    v = qkv[:, 2 * C:3 * C].reshape(T, n_head, hd).transpose(1, 0, 2)

    # scores: contract last dims, batch over heads (no explicit k.T transpose)
    att = lax.dot_general(q, k, (((2,), (2,)), ((0,), (0,))),
                          preferred_element_type=jnp.float32)           # (H, T, T)
    att = att * (1.0 / math.sqrt(hd))

    row = lax.broadcasted_iota(jnp.int32, (T, T), 0)
    col = lax.broadcasted_iota(jnp.int32, (T, T), 1)
    att = jnp.where((row >= col)[None, :, :], att, -jnp.inf)

    att = att - jnp.max(att, axis=-1, keepdims=True)
    p = jnp.exp(att)
    p = p / jnp.sum(p, axis=-1, keepdims=True)

    y = lax.dot_general(p, v, (((2,), (1,)), ((0,), (0,))),
                        preferred_element_type=jnp.float32)             # (H, T, hd)
    y = y.transpose(1, 0, 2).reshape(T, C)

    y = jnp.dot(y, wproj_ref[...],
                preferred_element_type=jnp.float32) + bproj_ref[...]
    x = x + y                                                           # residual 1

    # ----- MLP branch -----
    h2 = _layernorm(x, ln2w_ref[...], ln2b_ref[...])
    h2 = jnp.dot(h2, wfc_ref[...],
                 preferred_element_type=jnp.float32) + bfc_ref[...]
    h2 = _gelu_tanh(h2)
    h2 = jnp.dot(h2, wfc2_ref[...],
                 preferred_element_type=jnp.float32) + bfc2_ref[...]
    out_ref[...] = x + h2                                               # residual 2


def gpt2_head_kernel(x_ref, lnw_ref, lnb_ref, wlm_ref, out_ref):
    """ln_f + lm_head for one (row tile, vocab tile).  ln_f is cheap relative
    to the matmul, so it is recomputed per vocab tile instead of staged."""
    h = _layernorm(x_ref[...], lnw_ref[...], lnb_ref[...])
    out_ref[...] = jnp.dot(h, wlm_ref[...], preferred_element_type=jnp.float32)


# ------------------------------ pallas wrappers ------------------------------

def stack_block_params(blocks):
    """Stack per-layer params into (L, ...) arrays for layer-axis streaming."""
    C = blocks[0]["w_qkv"].shape[0]

    def stk(name, reshape=None):
        arrs = [blk[name] for blk in blocks]
        if reshape is not None:
            arrs = [a.reshape(reshape) for a in arrs]
        return jnp.stack(arrs, axis=0)

    return {
        "ln1_w": stk("ln1_w", (1, C)), "ln1_b": stk("ln1_b", (1, C)),
        "w_qkv": stk("w_qkv"),         "b_qkv": stk("b_qkv", (1, 3 * C)),
        "w_proj": stk("w_proj"),       "b_proj": stk("b_proj", (1, C)),
        "ln2_w": stk("ln2_w", (1, C)), "ln2_b": stk("ln2_b", (1, C)),
        "w_fc": stk("w_fc"),           "b_fc": stk("b_fc", (1, 4 * C)),
        "w_fc2": stk("w_fc2"),         "b_fc2": stk("b_fc2", (1, C)),
    }


def run_blocks(x2d, st, B, T, n_head):
    BT, C = x2d.shape
    L = st["w_qkv"].shape[0]

    def wspec(arr):
        _, d0, d1 = arr.shape
        # squeeze the layer dim; stream layer l's slice each inner grid step
        return pl.BlockSpec((None, d0, d1), lambda b, l: (l, 0, 0))

    order = ["ln1_w", "ln1_b", "w_qkv", "b_qkv", "w_proj", "b_proj",
             "ln2_w", "ln2_b", "w_fc", "b_fc", "w_fc2", "b_fc2"]
    weight_args = [st[name] for name in order]

    in_specs = ([pl.BlockSpec((T, C), lambda b, l: (b, 0))]
                + [wspec(a) for a in weight_args])

    return pl.pallas_call(
        functools.partial(gpt2_blocks_kernel, n_head),
        out_shape=jax.ShapeDtypeStruct((BT, C), x2d.dtype),
        grid=(B, L),
        in_specs=in_specs,
        # same block across the layer axis -> residual stays resident in VMEM
        out_specs=pl.BlockSpec((T, C), lambda b, l: (b, 0)),
        compiler_params=pltpu.CompilerParams(
            dimension_semantics=("parallel", "arbitrary"),
            vmem_limit_bytes=32 * 1024 * 1024),
    )(x2d, *weight_args)


def run_head(x2d, lnf_w, lnf_b, w_lm, *, row_tile=256, vocab_tile=512):
    BT, C = x2d.shape
    V = w_lm.shape[-1]

    rt = BT if BT <= row_tile else row_tile
    assert BT % rt == 0 and (rt == BT or rt % 8 == 0), "row tile must obey (8,128) rule"

    # lane-dense vocab tiling: tile is a multiple of 128; pad V up to it
    vt = vocab_tile if V >= vocab_tile else 128 * pl.cdiv(V, 128)
    Vp = vt * pl.cdiv(V, vt)
    w = w_lm if Vp == V else jnp.pad(w_lm, ((0, 0), (0, Vp - V)))

    logits = pl.pallas_call(
        gpt2_head_kernel,
        out_shape=jax.ShapeDtypeStruct((BT, Vp), x2d.dtype),
        grid=(BT // rt, Vp // vt),
        in_specs=[
            pl.BlockSpec((rt, C), lambda i, j: (i, 0)),
            pl.BlockSpec((1, C), lambda i, j: (0, 0)),
            pl.BlockSpec((1, C), lambda i, j: (0, 0)),
            pl.BlockSpec((C, vt), lambda i, j: (0, j)),
        ],
        out_specs=pl.BlockSpec((rt, vt), lambda i, j: (i, j)),
        compiler_params=pltpu.CompilerParams(
            dimension_semantics=("parallel", "parallel"),
            vmem_limit_bytes=32 * 1024 * 1024),
    )(x2d, lnf_w.reshape(1, C), lnf_b.reshape(1, C), w)

    return logits if Vp == V else logits[:, :V]


def gpt2_forward(params, input_ids, cfg):
    """Pallas-backed forward. input_ids: (B, T) int32 -> logits (B, T, vocab)."""
    B, T = input_ids.shape
    C = cfg["n_embed"]
    assert T <= cfg["block_size"]
    # Embedding gather is glue (plain JAX).
    tok = jnp.take(params["wte"], input_ids, axis=0)          # (B, T, C)
    pos = params["wpe"][:T][None, :, :]                       # (1, T, C)
    x = (tok + pos).reshape(B * T, C)

    stacked = stack_block_params(params["blocks"])
    x = run_blocks(x, stacked, B, T, cfg["n_head"])
    logits2d = run_head(x, params["lnf_w"], params["lnf_b"], params["lm_head"])
    return logits2d.reshape(B, T, cfg["vocab_size"])


# ----------------------------- pure-JAX reference ----------------------------

def gpt2_reference(params, input_ids, cfg):
    B, T = input_ids.shape
    C, H = cfg["n_embed"], cfg["n_head"]
    hd = C // H
    tok = jnp.take(params["wte"], input_ids, axis=0)
    pos = params["wpe"][:T][None, :, :]
    x = tok + pos                                             # (B, T, C)

    row = jnp.arange(T)[:, None]
    col = jnp.arange(T)[None, :]
    causal = row >= col

    for blk in params["blocks"]:
        h = _layernorm(x, blk["ln1_w"], blk["ln1_b"])
        qkv = jnp.einsum("btc,cd->btd", h, blk["w_qkv"]) + blk["b_qkv"]
        q, k, v = jnp.split(qkv, 3, axis=-1)
        q = q.reshape(B, T, H, hd).transpose(0, 2, 1, 3)
        k = k.reshape(B, T, H, hd).transpose(0, 2, 1, 3)
        v = v.reshape(B, T, H, hd).transpose(0, 2, 1, 3)
        att = jnp.einsum("bhqd,bhkd->bhqk", q, k) / math.sqrt(hd)
        att = jnp.where(causal[None, None], att, -jnp.inf)
        att = jax.nn.softmax(att, axis=-1)
        y = jnp.einsum("bhqk,bhkd->bhqd", att, v)
        y = y.transpose(0, 2, 1, 3).reshape(B, T, C)
        y = jnp.einsum("btc,cd->btd", y, blk["w_proj"]) + blk["b_proj"]
        x = x + y
        h2 = _layernorm(x, blk["ln2_w"], blk["ln2_b"])
        h2 = jnp.einsum("btc,cd->btd", h2, blk["w_fc"]) + blk["b_fc"]
        h2 = _gelu_tanh(h2)
        h2 = jnp.einsum("btd,dc->btc", h2, blk["w_fc2"]) + blk["b_fc2"]
        x = x + h2

    x = _layernorm(x, params["lnf_w"], params["lnf_b"])
    return jnp.einsum("btc,cv->btv", x, params["lm_head"])


# ------------------------------ parameter init -------------------------------

def init_params(key, block_size, vocab_size, n_layer, n_head, n_embed):
    C = n_embed

    def nrm(k, shape, scale=0.02):
        return (scale * jax.random.normal(k, shape)).astype(jnp.float32)

    keys = jax.random.split(key, 4 + n_layer)
    params = {
        "wte": nrm(keys[0], (vocab_size, C)),
        "wpe": nrm(keys[1], (block_size, C)),
        "lnf_w": jnp.ones((C,), jnp.float32),
        "lnf_b": jnp.zeros((C,), jnp.float32),
        "lm_head": nrm(keys[2], (C, vocab_size)),   # (in, out) = lm_head.weight.T
        "blocks": [],
    }
    for li in range(n_layer):
        lk = jax.random.split(keys[4 + li], 8)
        params["blocks"].append({
            "ln1_w": jnp.ones((C,), jnp.float32),
            "ln1_b": jnp.zeros((C,), jnp.float32),
            "w_qkv": nrm(lk[0], (C, 3 * C)),
            "b_qkv": nrm(lk[1], (3 * C,)),
            "w_proj": nrm(lk[2], (C, C)),
            "b_proj": nrm(lk[3], (C,)),
            "ln2_w": jnp.ones((C,), jnp.float32),
            "ln2_b": jnp.zeros((C,), jnp.float32),
            "w_fc": nrm(lk[4], (C, 4 * C)),
            "b_fc": nrm(lk[5], (4 * C,)),
            "w_fc2": nrm(lk[6], (4 * C, C)),
            "b_fc2": nrm(lk[7], (C,)),
        })
    return params


# ----------------------------------- main ------------------------------------

if __name__ == "__main__":
    # Small, forward-consistent shapes: B=2, T=8, vocab=128, 2 layers, 4 heads, C=32.
    cfg = dict(block_size=8, vocab_size=128, n_layer=2, n_head=4, n_embed=32)
    B, T = 2, 8

    key = jax.random.PRNGKey(0)
    params = init_params(key, **cfg)
    input_ids = jax.random.randint(jax.random.fold_in(key, 999), (B, T),
                                   0, cfg["vocab_size"], dtype=jnp.int32)

    logits = gpt2_forward(params, input_ids, cfg)
    logits = jax.block_until_ready(logits)

    assert logits.shape == (B, T, cfg["vocab_size"])
    ref = jax.block_until_ready(gpt2_reference(params, input_ids, cfg))
    np.testing.assert_allclose(np.asarray(logits), np.asarray(ref),
                               rtol=2e-2, atol=2e-2)
    # TODO(synk): labels/cross-entropy-loss branch of GPT2.forward not implemented
    # (inference-only logits path); embedding gather stays in plain JAX.
    print("KERNEL_OK")
</pallas_src>

<mosaic_0001>
module attributes {stable_mosaic.version = 11 : i64} {
  func.func @gpt2_blocks_kernel(%arg0: i32, %arg1: i32, %arg2: memref<8x32xf32, #tpu.memory_space<vmem>>, %arg3: memref<1x1x32xf32, #tpu.memory_space<vmem>>, %arg4: memref<1x1x32xf32, #tpu.memory_space<vmem>>, %arg5: memref<1x32x96xf32, #tpu.memory_space<vmem>>, %arg6: memref<1x1x96xf32, #tpu.memory_space<vmem>>, %arg7: memref<1x32x32xf32, #tpu.memory_space<vmem>>, %arg8: memref<1x1x32xf32, #tpu.memory_space<vmem>>, %arg9: memref<1x1x32xf32, #tpu.memory_space<vmem>>, %arg10: memref<1x1x32xf32, #tpu.memory_space<vmem>>, %arg11: memref<1x32x128xf32, #tpu.memory_space<vmem>>, %arg12: memref<1x1x128xf32, #tpu.memory_space<vmem>>, %arg13: memref<1x128x32xf32, #tpu.memory_space<vmem>>, %arg14: memref<1x1x32xf32, #tpu.memory_space<vmem>>, %arg15: memref<8x32xf32, #tpu.memory_space<vmem>>) attributes {dimension_semantics = [#tpu.dimension_semantics<parallel>, #tpu.dimension_semantics<arbitrary>], iteration_bounds = array<i64: 2, 2>, scalar_prefetch = 0 : i64, scratch_operands = 0 : i64, tpu.core_type = #tpu.core_type<tc>, window_params = [{transform_indices = @transform_0, window_bounds = array<i64: 8, 32>}, {transform_indices = @transform_1, window_bounds = array<i64: 1, 1, 32>}, {transform_indices = @transform_2, window_bounds = array<i64: 1, 1, 32>}, {transform_indices = @transform_3, window_bounds = array<i64: 1, 32, 96>}, {transform_indices = @transform_4, window_bounds = array<i64: 1, 1, 96>}, {transform_indices = @transform_5, window_bounds = array<i64: 1, 32, 32>}, {transform_indices = @transform_6, window_bounds = array<i64: 1, 1, 32>}, {transform_indices = @transform_7, window_bounds = array<i64: 1, 1, 32>}, {transform_indices = @transform_8, window_bounds = array<i64: 1, 1, 32>}, {transform_indices = @transform_9, window_bounds = array<i64: 1, 32, 128>}, {transform_indices = @transform_10, window_bounds = array<i64: 1, 1, 128>}, {transform_indices = @transform_11, window_bounds = array<i64: 1, 128, 32>}, {transform_indices = @transform_12, window_bounds = array<i64: 1, 1, 32>}, {transform_indices = @transform_13, window_bounds = array<i64: 8, 32>}]} {
    %c0_i32 = arith.constant 0 : i32
    %0 = arith.cmpi eq, %arg1, %c0_i32 : i32
    %1 = arith.extui %0 : i1 to i32
    %c0_i32_0 = arith.constant 0 : i32
    %2 = arith.cmpi ne, %1, %c0_i32_0 : i32
    scf.if %2 {
      %c0_63 = arith.constant 0 : index
      %c0_64 = arith.constant 0 : index
      %132 = vector.load %arg2[%c0_63, %c0_64] : memref<8x32xf32, #tpu.memory_space<vmem>>, vector<8x32xf32>
      %c0_65 = arith.constant 0 : index
      %c0_66 = arith.constant 0 : index
      %133 = vector.load %arg15[%c0_65, %c0_66] : memref<8x32xf32, #tpu.memory_space<vmem>>, vector<8x32xf32>
      tpu.vector_store %arg15[%c0_65, %c0_66], %132 {strides = array<i32>} : memref<8x32xf32, #tpu.memory_space<vmem>>, vector<8x32xf32>,
    } else {
    }
    %c0 = arith.constant 0 : index
    %c0_1 = arith.constant 0 : index
    %3 = vector.load %arg15[%c0, %c0_1] : memref<8x32xf32, #tpu.memory_space<vmem>>, vector<8x32xf32>
    %c0_2 = arith.constant 0 : index
    %c0_3 = arith.constant 0 : index
    %c0_4 = arith.constant 0 : index
    %4 = vector.load %arg3[%c0_2, %c0_3, %c0_4] : memref<1x1x32xf32, #tpu.memory_space<vmem>>, vector<1x1x32xf32>
    %5 = vector.shape_cast %4 : vector<1x1x32xf32> to vector<1x32xf32>
    %c0_5 = arith.constant 0 : index
    %c0_6 = arith.constant 0 : index
    %c0_7 = arith.constant 0 : index
    %6 = vector.load %arg4[%c0_5, %c0_6, %c0_7] : memref<1x1x32xf32, #tpu.memory_space<vmem>>, vector<1x1x32xf32>
    %7 = vector.shape_cast %6 : vector<1x1x32xf32> to vector<1x32xf32>
    %cst = arith.constant dense<0.000000e+00> : vector<8xf32>
    %8 = vector.multi_reduction <add>, %3, %cst [1] : vector<8x32xf32> to vector<8xf32>
    %9 = vector.shape_cast %8 : vector<8xf32> to vector<8x1xf32>
    %cst_8 = arith.constant 3.200000e+01 : f32
    %10 = vector.broadcast %cst_8 : f32 to vector<8x1xf32>
    %11 = arith.divf %9, %10 : vector<8x1xf32>
    %12 = vector.broadcast %11 : vector<8x1xf32> to vector<8x32xf32>
    %13 = arith.subf %3, %12 : vector<8x32xf32>
    %14 = arith.mulf %13, %13 : vector<8x32xf32>
    %cst_9 = arith.constant dense<0.000000e+00> : vector<8xf32>
    %15 = vector.multi_reduction <add>, %14, %cst_9 [1] : vector<8x32xf32> to vector<8xf32>
    %16 = vector.shape_cast %15 : vector<8xf32> to vector<8x1xf32>
    %cst_10 = arith.constant 3.200000e+01 : f32
    %17 = vector.broadcast %cst_10 : f32 to vector<8x1xf32>
    %18 = arith.divf %16, %17 : vector<8x1xf32>
    %19 = vector.broadcast %11 : vector<8x1xf32> to vector<8x32xf32>
    %20 = arith.subf %3, %19 : vector<8x32xf32>
    %cst_11 = arith.constant 9.99999974E-6 : f32
    %21 = vector.broadcast %cst_11 : f32 to vector<8x1xf32>
    %22 = arith.addf %18, %21 : vector<8x1xf32>
    %23 = math.rsqrt %22 : vector<8x1xf32>
    %24 = vector.broadcast %23 : vector<8x1xf32> to vector<8x32xf32>
    %25 = arith.mulf %20, %24 : vector<8x32xf32>
    %26 = vector.broadcast %5 : vector<1x32xf32> to vector<8x32xf32>
    %27 = arith.mulf %25, %26 : vector<8x32xf32>
    %28 = vector.broadcast %7 : vector<1x32xf32> to vector<8x32xf32>
    %29 = arith.addf %27, %28 : vector<8x32xf32>
    %c0_12 = arith.constant 0 : index
    %c0_13 = arith.constant 0 : index
    %c0_14 = arith.constant 0 : index
    %30 = vector.load %arg5[%c0_12, %c0_13, %c0_14] : memref<1x32x96xf32, #tpu.memory_space<vmem>>, vector<1x32x96xf32>
    %31 = vector.shape_cast %30 : vector<1x32x96xf32> to vector<32x96xf32>
    %cst_15 = arith.constant dense<0.000000e+00> : vector<8x96xf32>
    %32 = tpu.matmul %29, %31, %cst_15 {dimension_numbers = #tpu.dot_dimension_numbers<[1], [0], [0], [1], [0, 0, 1, 1], [], []>} : vector<8x32xf32>, vector<32x96xf32>, vector<8x96xf32> -> vector<8x96xf32>
    %c0_16 = arith.constant 0 : index
    %c0_17 = arith.constant 0 : index
    %c0_18 = arith.constant 0 : index
    %33 = vector.load %arg6[%c0_16, %c0_17, %c0_18] : memref<1x1x96xf32, #tpu.memory_space<vmem>>, vector<1x1x96xf32>
    %34 = vector.shape_cast %33 : vector<1x1x96xf32> to vector<1x96xf32>
    %35 = vector.broadcast %34 : vector<1x96xf32> to vector<8x96xf32>
    %36 = arith.addf %32, %35 : vector<8x96xf32>
    %37 = vector.extract_strided_slice %36 {offsets = [0, 0], sizes = [8, 32], strides = [1, 1]} : vector<8x96xf32> to vector<8x32xf32>
    %38 = vector.shape_cast %37 : vector<8x32xf32> to vector<8x4x8xf32>
    %39 = tpu.transpose %38, [1, 0, 2] : vector<8x4x8xf32> -> vector<4x8x8xf32>
    %40 = vector.extract_strided_slice %36 {offsets = [0, 32], sizes = [8, 32], strides = [1, 1]} : vector<8x96xf32> to vector<8x32xf32>
    %41 = vector.shape_cast %40 : vector<8x32xf32> to vector<8x4x8xf32>
    %42 = tpu.transpose %41, [1, 0, 2] : vector<8x4x8xf32> -> vector<4x8x8xf32>
    %43 = vector.extract_strided_slice %36 {offsets = [0, 64], sizes = [8, 32], strides = [1, 1]} : vector<8x96xf32> to vector<8x32xf32>
    %44 = vector.shape_cast %43 : vector<8x32xf32> to vector<8x4x8xf32>
    %45 = tpu.transpose %44, [1, 0, 2] : vector<8x4x8xf32> -> vector<4x8x8xf32>
    %cst_19 = arith.constant dense<0.000000e+00> : vector<4x8x8xf32>
    %46 = tpu.matmul %39, %42, %cst_19 {dimension_numbers = #tpu.dot_dimension_numbers<[2], [2], [1], [1], [0, 0, 0, 1, 1, 1], [0], [0]>} : vector<4x8x8xf32>, vector<4x8x8xf32>, vector<4x8x8xf32> -> vector<4x8x8xf32>
    %cst_20 = arith.constant 0.353553385 : f32
    %47 = vector.broadcast %cst_20 : f32 to vector<4x8x8xf32>
    %48 = arith.mulf %46, %47 : vector<4x8x8xf32>
    %49 = tpu.iota {dimensions = array<i32: 0>} : vector<8x8xi32>
    %50 = tpu.iota {dimensions = array<i32: 1>} : vector<8x8xi32>
    %51 = arith.cmpi sge, %49, %50 : vector<8x8xi32>
    %52 = vector.shape_cast %51 : vector<8x8xi1> to vector<1x8x8xi1>
    %cst_21 = arith.constant 0xFF800000 : f32
    %53 = vector.shape_cast %52 : vector<1x8x8xi1> to vector<1x8x8xi1>
    %54 = vector.broadcast %53 : vector<1x8x8xi1> to vector<4x8x8xi1>
    %55 = vector.broadcast %cst_21 : f32 to vector<4x8x8xf32>
    %56 = arith.select %54, %48, %55 : vector<4x8x8xi1>, vector<4x8x8xf32>
    %cst_22 = arith.constant dense<0xFF800000> : vector<4x8xf32>
    %57 = vector.multi_reduction <maximumf>, %56, %cst_22 [2] : vector<4x8x8xf32> to vector<4x8xf32>
    %58 = vector.shape_cast %57 : vector<4x8xf32> to vector<4x8x1xf32>
    %59 = vector.broadcast %58 : vector<4x8x1xf32> to vector<4x8x8xf32>
    %60 = arith.subf %56, %59 : vector<4x8x8xf32>
    %61 = math.exp %60 : vector<4x8x8xf32>
    %cst_23 = arith.constant dense<0.000000e+00> : vector<4x8xf32>
    %62 = vector.multi_reduction <add>, %61, %cst_23 [2] : vector<4x8x8xf32> to vector<4x8xf32>
    %63 = vector.shape_cast %62 : vector<4x8xf32> to vector<4x8x1xf32>
    %64 = vector.broadcast %63 : vector<4x8x1xf32> to vector<4x8x8xf32>
    %65 = arith.divf %61, %64 : vector<4x8x8xf32>
    %cst_24 = arith.constant dense<0.000000e+00> : vector<4x8x8xf32>
    %66 = tpu.matmul %65, %45, %cst_24 {dimension_numbers = #tpu.dot_dimension_numbers<[2], [1], [1], [2], [0, 0, 0, 1, 1, 2], [0], [0]>} : vector<4x8x8xf32>, vector<4x8x8xf32>, vector<4x8x8xf32> -> vector<4x8x8xf32>
    %67 = tpu.transpose %66, [1, 0, 2] : vector<4x8x8xf32> -> vector<8x4x8xf32>
    %68 = vector.shape_cast %67 : vector<8x4x8xf32> to vector<8x32xf32>
    %c0_25 = arith.constant 0 : index
    %c0_26 = arith.constant 0 : index
    %c0_27 = arith.constant 0 : index
    %69 = vector.load %arg7[%c0_25, %c0_26, %c0_27] : memref<1x32x32xf32, #tpu.memory_space<vmem>>, vector<1x32x32xf32>
    %70 = vector.shape_cast %69 : vector<1x32x32xf32> to vector<32x32xf32>
    %cst_28 = arith.constant dense<0.000000e+00> : vector<8x32xf32>
    %71 = tpu.matmul %68, %70, %cst_28 {dimension_numbers = #tpu.dot_dimension_numbers<[1], [0], [0], [1], [0, 0, 1, 1], [], []>} : vector<8x32xf32>, vector<32x32xf32>, vector<8x32xf32> -> vector<8x32xf32>
    %c0_29 = arith.constant 0 : index
    %c0_30 = arith.constant 0 : index
    %c0_31 = arith.constant 0 : index
    %72 = vector.load %arg8[%c0_29, %c0_30, %c0_31] : memref<1x1x32xf32, #tpu.memory_space<vmem>>, vector<1x1x32xf32>
    %73 = vector.shape_cast %72 : vector<1x1x32xf32> to vector<1x32xf32>
    %74 = vector.broadcast %73 : vector<1x32xf32> to vector<8x32xf32>
    %75 = arith.addf %71, %74 : vector<8x32xf32>
    %76 = arith.addf %3, %75 : vector<8x32xf32>
    %c0_32 = arith.constant 0 : index
    %c0_33 = arith.constant 0 : index
    %c0_34 = arith.constant 0 : index
    %77 = vector.load %arg9[%c0_32, %c0_33, %c0_34] : memref<1x1x32xf32, #tpu.memory_space<vmem>>, vector<1x1x32xf32>
    %78 = vector.shape_cast %77 : vector<1x1x32xf32> to vector<1x32xf32>
    %c0_35 = arith.constant 0 : index
    %c0_36 = arith.constant 0 : index
    %c0_37 = arith.constant 0 : index
    %79 = vector.load %arg10[%c0_35, %c0_36, %c0_37] : memref<1x1x32xf32, #tpu.memory_space<vmem>>, vector<1x1x32xf32>
    %80 = vector.shape_cast %79 : vector<1x1x32xf32> to vector<1x32xf32>
    %cst_38 = arith.constant dense<0.000000e+00> : vector<8xf32>
    %81 = vector.multi_reduction <add>, %76, %cst_38 [1] : vector<8x32xf32> to vector<8xf32>
    %82 = vector.shape_cast %81 : vector<8xf32> to vector<8x1xf32>
    %cst_39 = arith.constant 3.200000e+01 : f32
    %83 = vector.broadcast %cst_39 : f32 to vector<8x1xf32>
    %84 = arith.divf %82, %83 : vector<8x1xf32>
    %85 = vector.broadcast %84 : vector<8x1xf32> to vector<8x32xf32>
    %86 = arith.subf %76, %85 : vector<8x32xf32>
    %87 = arith.mulf %86, %86 : vector<8x32xf32>
    %cst_40 = arith.constant dense<0.000000e+00> : vector<8xf32>
    %88 = vector.multi_reduction <add>, %87, %cst_40 [1] : vector<8x32xf32> to vector<8xf32>
    %89 = vector.shape_cast %88 : vector<8xf32> to vector<8x1xf32>
    %cst_41 = arith.constant 3.200000e+01 : f32
    %90 = vector.broadcast %cst_41 : f32 to vector<8x1xf32>
    %91 = arith.divf %89, %90 : vector<8x1xf32>
    %92 = vector.broadcast %84 : vector<8x1xf32> to vector<8x32xf32>
    %93 = arith.subf %76, %92 : vector<8x32xf32>
    %cst_42 = arith.constant 9.99999974E-6 : f32
    %94 = vector.broadcast %cst_42 : f32 to vector<8x1xf32>
    %95 = arith.addf %91, %94 : vector<8x1xf32>
    %96 = math.rsqrt %95 : vector<8x1xf32>
    %97 = vector.broadcast %96 : vector<8x1xf32> to vector<8x32xf32>
    %98 = arith.mulf %93, %97 : vector<8x32xf32>
    %99 = vector.broadcast %78 : vector<1x32xf32> to vector<8x32xf32>
    %100 = arith.mulf %98, %99 : vector<8x32xf32>
    %101 = vector.broadcast %80 : vector<1x32xf32> to vector<8x32xf32>
    %102 = arith.addf %100, %101 : vector<8x32xf32>
    %c0_43 = arith.constant 0 : index
    %c0_44 = arith.constant 0 : index
    %c0_45 = arith.constant 0 : index
    %103 = vector.load %arg11[%c0_43, %c0_44, %c0_45] : memref<1x32x128xf32, #tpu.memory_space<vmem>>, vector<1x32x128xf32>
    %104 = vector.shape_cast %103 : vector<1x32x128xf32> to vector<32x128xf32>
    %cst_46 = arith.constant dense<0.000000e+00> : vector<8x128xf32>
    %105 = tpu.matmul %102, %104, %cst_46 {dimension_numbers = #tpu.dot_dimension_numbers<[1], [0], [0], [1], [0, 0, 1, 1], [], []>} : vector<8x32xf32>, vector<32x128xf32>, vector<8x128xf32> -> vector<8x128xf32>
    %c0_47 = arith.constant 0 : index
    %c0_48 = arith.constant 0 : index
    %c0_49 = arith.constant 0 : index
    %106 = vector.load %arg12[%c0_47, %c0_48, %c0_49] : memref<1x1x128xf32, #tpu.memory_space<vmem>>, vector<1x1x128xf32>
    %107 = vector.shape_cast %106 : vector<1x1x128xf32> to vector<1x128xf32>
    %108 = vector.broadcast %107 : vector<1x128xf32> to vector<8x128xf32>
    %109 = arith.addf %105, %108 : vector<8x128xf32>
    %cst_50 = arith.constant 5.000000e-01 : f32
    %110 = vector.broadcast %cst_50 : f32 to vector<8x128xf32>
    %111 = arith.mulf %110, %109 : vector<8x128xf32>
    %cst_51 = arith.constant 4.471500e-02 : f32
    %112 = vector.broadcast %cst_51 : f32 to vector<8x128xf32>
    %113 = arith.mulf %112, %109 : vector<8x128xf32>
    %114 = arith.mulf %113, %109 : vector<8x128xf32>
    %115 = arith.mulf %114, %109 : vector<8x128xf32>
    %116 = arith.addf %109, %115 : vector<8x128xf32>
    %cst_52 = arith.constant 0.797884583 : f32
    %117 = vector.broadcast %cst_52 : f32 to vector<8x128xf32>
    %118 = arith.mulf %117, %116 : vector<8x128xf32>
    %119 = math.tanh %118 : vector<8x128xf32>
    %cst_53 = arith.constant 1.000000e+00 : f32
    %120 = vector.broadcast %cst_53 : f32 to vector<8x128xf32>
    %121 = arith.addf %120, %119 : vector<8x128xf32>
    %122 = arith.mulf %111, %121 : vector<8x128xf32>
    %c0_54 = arith.constant 0 : index
    %c0_55 = arith.constant 0 : index
    %c0_56 = arith.constant 0 : index
    %123 = vector.load %arg13[%c0_54, %c0_55, %c0_56] : memref<1x128x32xf32, #tpu.memory_space<vmem>>, vector<1x128x32xf32>
    %124 = vector.shape_cast %123 : vector<1x128x32xf32> to vector<128x32xf32>
    %cst_57 = arith.constant dense<0.000000e+00> : vector<8x32xf32>
    %125 = tpu.matmul %122, %124, %cst_57 {dimension_numbers = #tpu.dot_dimension_numbers<[1], [0], [0], [1], [0, 0, 1, 1], [], []>} : vector<8x128xf32>, vector<128x32xf32>, vector<8x32xf32> -> vector<8x32xf32>
    %c0_58 = arith.constant 0 : index
    %c0_59 = arith.constant 0 : index
    %c0_60 = arith.constant 0 : index
    %126 = vector.load %arg14[%c0_58, %c0_59, %c0_60] : memref<1x1x32xf32, #tpu.memory_space<vmem>>, vector<1x1x32xf32>
    %127 = vector.shape_cast %126 : vector<1x1x32xf32> to vector<1x32xf32>
    %128 = vector.broadcast %127 : vector<1x32xf32> to vector<8x32xf32>
    %129 = arith.addf %125, %128 : vector<8x32xf32>
    %130 = arith.addf %76, %129 : vector<8x32xf32>
    %c0_61 = arith.constant 0 : index
    %c0_62 = arith.constant 0 : index
    %131 = vector.load %arg15[%c0_61, %c0_62] : memref<8x32xf32, #tpu.memory_space<vmem>>, vector<8x32xf32>
    tpu.vector_store %arg15[%c0_61, %c0_62], %130 {strides = array<i32>} : memref<8x32xf32, #tpu.memory_space<vmem>>, vector<8x32xf32>,
    return
  }
  func.func @transform_0(%arg0: i32, %arg1: i32) -> (i32, i32) {
    %c0_i32 = arith.constant 0 : i32
    %c0_i32_0 = arith.constant 0 : i32
    return %arg0, %c0_i32 : i32, i32
  }
  func.func @transform_1(%arg0: i32, %arg1: i32) -> (i32, i32, i32) {
    %c0_i32 = arith.constant 0 : i32
    %c0_i32_0 = arith.constant 0 : i32
    %c0_i32_1 = arith.constant 0 : i32
    return %arg1, %c0_i32, %c0_i32_0 : i32, i32, i32
  }
  func.func @transform_2(%arg0: i32, %arg1: i32) -> (i32, i32, i32) {
    %c0_i32 = arith.constant 0 : i32
    %c0_i32_0 = arith.constant 0 : i32
    %c0_i32_1 = arith.constant 0 : i32
    return %arg1, %c0_i32, %c0_i32_0 : i32, i32, i32
  }
  func.func @transform_3(%arg0: i32, %arg1: i32) -> (i32, i32, i32) {
    %c0_i32 = arith.constant 0 : i32
    %c0_i32_0 = arith.constant 0 : i32
    %c0_i32_1 = arith.constant 0 : i32
    return %arg1, %c0_i32, %c0_i32_0 : i32, i32, i32
  }
  func.func @transform_4(%arg0: i32, %arg1: i32) -> (i32, i32, i32) {
    %c0_i32 = arith.constant 0 : i32
    %c0_i32_0 = arith.constant 0 : i32
    %c0_i32_1 = arith.constant 0 : i32
    return %arg1, %c0_i32, %c0_i32_0 : i32, i32, i32
  }
  func.func @transform_5(%arg0: i32, %arg1: i32) -> (i32, i32, i32) {
    %c0_i32 = arith.constant 0 : i32
    %c0_i32_0 = arith.constant 0 : i32
    %c0_i32_1 = arith.constant 0 : i32
    return %arg1, %c0_i32, %c0_i32_0 : i32, i32, i32
  }
  func.func @transform_6(%arg0: i32, %arg1: i32) -> (i32, i32, i32) {
    %c0_i32 = arith.constant 0 : i32
    %c0_i32_0 = arith.constant 0 : i32
    %c0_i32_1 = arith.constant 0 : i32
    return %arg1, %c0_i32, %c0_i32_0 : i32, i32, i32
  }
  func.func @transform_7(%arg0: i32, %arg1: i32) -> (i32, i32, i32) {
    %c0_i32 = arith.constant 0 : i32
    %c0_i32_0 = arith.constant 0 : i32
    %c0_i32_1 = arith.constant 0 : i32
    return %arg1, %c0_i32, %c0_i32_0 : i32, i32, i32
  }
  func.func @transform_8(%arg0: i32, %arg1: i32) -> (i32, i32, i32) {
    %c0_i32 = arith.constant 0 : i32
    %c0_i32_0 = arith.constant 0 : i32
    %c0_i32_1 = arith.constant 0 : i32
    return %arg1, %c0_i32, %c0_i32_0 : i32, i32, i32
  }
  func.func @transform_9(%arg0: i32, %arg1: i32) -> (i32, i32, i32) {
    %c0_i32 = arith.constant 0 : i32
    %c0_i32_0 = arith.constant 0 : i32
    %c0_i32_1 = arith.constant 0 : i32
    return %arg1, %c0_i32, %c0_i32_0 : i32, i32, i32
  }
  func.func @transform_10(%arg0: i32, %arg1: i32) -> (i32, i32, i32) {
    %c0_i32 = arith.constant 0 : i32
    %c0_i32_0 = arith.constant 0 : i32
    %c0_i32_1 = arith.constant 0 : i32
    return %arg1, %c0_i32, %c0_i32_0 : i32, i32, i32
  }
  func.func @transform_11(%arg0: i32, %arg1: i32) -> (i32, i32, i32) {
    %c0_i32 = arith.constant 0 : i32
    %c0_i32_0 = arith.constant 0 : i32
    %c0_i32_1 = arith.constant 0 : i32
    return %arg1, %c0_i32, %c0_i32_0 : i32, i32, i32
  }
  func.func @transform_12(%arg0: i32, %arg1: i32) -> (i32, i32, i32) {
    %c0_i32 = arith.constant 0 : i32
    %c0_i32_0 = arith.constant 0 : i32
    %c0_i32_1 = arith.constant 0 : i32
    return %arg1, %c0_i32, %c0_i32_0 : i32, i32, i32
  }
  func.func @transform_13(%arg0: i32, %arg1: i32) -> (i32, i32) {
    %c0_i32 = arith.constant 0 : i32
    %c0_i32_0 = arith.constant 0 : i32
    return %arg0, %c0_i32 : i32, i32
  }
}

</mosaic_0001>

<llo_original>
// kernel: tpu_custom_call.1
$region0: #{tpu_custom_call.1}
  #allocation0 [shape = 'u32[]', space=smem, size = 0x4, offset = 0x4, fixed_abs, tag = 'smem constant byte address 0x4 - core index']
  #allocation1 [shape = 'u32[72,128]{1,0:T(1,128)}', space=vmem, size = 0x9000, scoped, tag = 'internal scratch']
  %s0 = inlined_call_operand.vmem [shape: f32[16,32], index: 0, kind: input, shape index: {}]
  %s1 = inlined_call_operand.vmem [shape: f32[2,1,32], index: 1, kind: input, shape index: {}]
  %s2 = inlined_call_operand.vmem [shape: f32[2,1,32], index: 2, kind: input, shape index: {}]
  %s3 = inlined_call_operand.vmem [shape: f32[2,32,96], index: 3, kind: input, shape index: {}]
  %s4 = inlined_call_operand.vmem [shape: f32[2,1,96], index: 4, kind: input, shape index: {}]
  %s5 = inlined_call_operand.vmem [shape: f32[2,32,32], index: 5, kind: input, shape index: {}]
  %s6 = inlined_call_operand.vmem [shape: f32[2,1,32], index: 6, kind: input, shape index: {}]
  %s7 = inlined_call_operand.vmem [shape: f32[2,1,32], index: 7, kind: input, shape index: {}]
  %s8 = inlined_call_operand.vmem [shape: f32[2,1,32], index: 8, kind: input, shape index: {}]
  %s9 = inlined_call_operand.vmem [shape: f32[2,32,128], index: 9, kind: input, shape index: {}]
  %s10 = inlined_call_operand.vmem [shape: f32[2,1,128], index: 10, kind: input, shape index: {}]
  %s11 = inlined_call_operand.vmem [shape: f32[2,128,32], index: 11, kind: input, shape index: {}]
  %s12 = inlined_call_operand.vmem [shape: f32[2,1,32], index: 12, kind: input, shape index: {}]
  %s13 = inlined_call_operand.hbm [shape: f32[16,32], index: 13, kind: output, shape index: {}]
  %s14 = sld [smem:[#allocation0]]
  $region89: #{tpu_custom_call.1} parent=0
    _
  %s16 = ssub.s32 1, %s14
  %s17 = scalar_select 0, %s16, %s14
  $region1: #{tpu_custom_call.1} parent=0
    #allocation2 [shape = 'u8[8192]{0}', space=vmem, size = 0x2000, scoped, tag = 'output window, operand 0']
    #allocation3 [shape = 's32[2]{0}', space=sflag, size = 0x8, scoped, tag = 'scoped memory for tpu_custom_call.1']
    %18 = vsyncpa [#allocation3], 0
    %s19 = scalar_lea.sflag [#allocation3], 1
    %20 = vsyncpa %s19, 0
    loop: start=0, step=1, limit=6
    $region2: #{tpu_custom_call.1} parent=1 // loop_pre_header
      _
    $region3: #{tpu_custom_call.1} parent=1 // loop_header
      %s22 = sphi 0, %s26
      %p23 = scmp.ge.s32.totalorder %s22, 6
      %s29 = sphi 0, %s41
      %s30 = sphi 0, %s37
      %s31 = sphi 0, %s29
      %s32 = sphi 0, %s30
      %s33 = sphi 0, %s31
      %s34 = sphi 0, %s32
      %s44 = sphi 0, %s46
      %s47 = sphi 0, %s44
      %s48 = sphi 0, %s47
      %s64 = sphi 0, %s48
      %s70 = sphi 0, %s72
      %s73 = sphi 0, %s70
      %s74 = sphi 0, %s73
      %s90 = sphi 0, %s74
      %s96 = sphi 0, %s98
      %s99 = sphi 0, %s96
      %s100 = sphi 0, %s99
      %s116 = sphi 0, %s100
      %s122 = sphi 0, %s124
      %s125 = sphi 0, %s122
      %s126 = sphi 0, %s125
      %s142 = sphi 0, %s126
      %s148 = sphi 0, %s150
      %s151 = sphi 0, %s148
      %s152 = sphi 0, %s151
      %s168 = sphi 0, %s152
      %s174 = sphi 0, %s176
      %s177 = sphi 0, %s174
      %s178 = sphi 0, %s177
      %s194 = sphi 0, %s178
      %s200 = sphi 0, %s202
      %s203 = sphi 0, %s200
      %s204 = sphi 0, %s203
      %s220 = sphi 0, %s204
      %s226 = sphi 0, %s228
      %s229 = sphi 0, %s226
      %s230 = sphi 0, %s229
      %s246 = sphi 0, %s230
      %s252 = sphi 0, %s254
      %s255 = sphi 0, %s252
      %s256 = sphi 0, %s255
      %s272 = sphi 0, %s256
      %s278 = sphi 0, %s280
      %s281 = sphi 0, %s278
      %s282 = sphi 0, %s281
      %s298 = sphi 0, %s282
      %s304 = sphi 0, %s306
      %s307 = sphi 0, %s304
      %s308 = sphi 0, %s307
      %s324 = sphi 0, %s308
      %s330 = sphi 0, %s332
      %s333 = sphi 0, %s330
      %s334 = sphi 0, %s333
      %s350 = sphi 0, %s334
      %s356 = sphi 0, %s358
      %s359 = sphi 0, %s356
      %s360 = sphi 0, %s359
      %s376 = sphi 0, %s360
      %s382 = sphi 0, %s384
      %s385 = sphi 0, %s382
      %s386 = sphi 0, %s385
      %s402 = sphi 0, %s386
    $region4: #{tpu_custom_call.1} parent=1 // loop_header_branch
      %25 = sbr.rel (%p23) target = $region8
    $region5: #{tpu_custom_call.1} parent=1 // loop_body
      %s27 = ssub.s32 %s22, 1
      %s28 = ssub.s32 %s22, 2
      %s35 = sadd.s32 1, %s30
      %p36 = scmp.ge.s32.totalorder %s35, 2
      %s37 = scalar_select %p36, 0, %s35
      %s38 = sadd.s32 1, %s29
      %s39 = scalar_select %p36, %s38, %s29
      %p40 = scmp.ge.s32.totalorder %s39, 2
      %s41 = scalar_select %p40, 0, %s39
      %s42 = ssub.s32 %s29, %s41
      %p43 = scmp.eq.s32.totalorder %s42, 0
      %s45 = sadd.s32 %s44, 1
      %s46 = scalar_select %p43, %s44, %s45
      %p49 = pneg %p43
      %p50 = scmp.eq.s32.totalorder %s22, 3
      %p51 = por %p49, %p50
      %p52 = scmp.ne.s32.totalorder %s44, %s47
      %p53 = scmp.eq.s32.totalorder %s22, 0
      %p54 = por %p52, %p53
      %p55 = scmp.ne.s32.totalorder %s44, %s47
      %p56 = scmp.eq.s32.totalorder %s27, 3
      %p57 = por %p55, %p56
      %p58 = scmp.ne.s32.totalorder %s47, %s48
      %p59 = scmp.eq.s32.totalorder %s27, 0
      %p60 = por %p58, %p59
      %p61 = scmp.ne.s32.totalorder %s47, %s48
      %p62 = scmp.eq.s32.totalorder %s28, 3
      %p63 = por %p61, %p62
      %p65 = scmp.ne.s32.totalorder %s48, %s64
      %p66 = scmp.eq.s32.totalorder %s28, 0
      %p67 = por %p65, %p66
      %s68 = ssub.s32 %s30, %s37
      %p69 = scmp.eq.s32.totalorder %s68, 0
      %s71 = sadd.s32 %s70, 1
      %s72 = scalar_select %p69, %s70, %s71
      %p75 = pneg %p69
      %p76 = scmp.eq.s32.totalorder %s22, 3
      %p77 = por %p75, %p76
      %p78 = scmp.ne.s32.totalorder %s70, %s73
      %p79 = scmp.eq.s32.totalorder %s22, 0
      %p80 = por %p78, %p79
      %p81 = scmp.ne.s32.totalorder %s70, %s73
      %p82 = scmp.eq.s32.totalorder %s27, 3
      %p83 = por %p81, %p82
      %p84 = scmp.ne.s32.totalorder %s73, %s74
      %p85 = scmp.eq.s32.totalorder %s27, 0
      %p86 = por %p84, %p85
      %p87 = scmp.ne.s32.totalorder %s73, %s74
      %p88 = scmp.eq.s32.totalorder %s28, 3
      %p89 = por %p87, %p88
      %p91 = scmp.ne.s32.totalorder %s74, %s90
      %p92 = scmp.eq.s32.totalorder %s28, 0
      %p93 = por %p91, %p92
      %s94 = ssub.s32 %s30, %s37
      %p95 = scmp.eq.s32.totalorder %s94, 0
      %s97 = sadd.s32 %s96, 1
      %s98 = scalar_select %p95, %s96, %s97
      %p101 = pneg %p95
      %p102 = scmp.eq.s32.totalorder %s22, 3
      %p103 = por %p101, %p102
      %p104 = scmp.ne.s32.totalorder %s96, %s99
      %p105 = scmp.eq.s32.totalorder %s22, 0
      %p106 = por %p104, %p105
      %p107 = scmp.ne.s32.totalorder %s96, %s99
      %p108 = scmp.eq.s32.totalorder %s27, 3
      %p109 = por %p107, %p108
      %p110 = scmp.ne.s32.totalorder %s99, %s100
      %p111 = scmp.eq.s32.totalorder %s27, 0
      %p112 = por %p110, %p111
      %p113 = scmp.ne.s32.totalorder %s99, %s100
      %p114 = scmp.eq.s32.totalorder %s28, 3
      %p115 = por %p113, %p114
      %p117 = scmp.ne.s32.totalorder %s100, %s116
      %p118 = scmp.eq.s32.totalorder %s28, 0
      %p119 = por %p117, %p118
      %s120 = ssub.s32 %s30, %s37
      %p121 = scmp.eq.s32.totalorder %s120, 0
      %s123 = sadd.s32 %s122, 1
      %s124 = scalar_select %p121, %s122, %s123
      %p127 = pneg %p121
      %p128 = scmp.eq.s32.totalorder %s22, 3
      %p129 = por %p127, %p128
      %p130 = scmp.ne.s32.totalorder %s122, %s125
      %p131 = scmp.eq.s32.totalorder %s22, 0
      %p132 = por %p130, %p131
      %p133 = scmp.ne.s32.totalorder %s122, %s125
      %p134 = scmp.eq.s32.totalorder %s27, 3
      %p135 = por %p133, %p134
      %p136 = scmp.ne.s32.totalorder %s125, %s126
      %p137 = scmp.eq.s32.totalorder %s27, 0
      %p138 = por %p136, %p137
      %p139 = scmp.ne.s32.totalorder %s125, %s126
      %p140 = scmp.eq.s32.totalorder %s28, 3
      %p141 = por %p139, %p140
      %p143 = scmp.ne.s32.totalorder %s126, %s142
      %p144 = scmp.eq.s32.totalorder %s28, 0
      %p145 = por %p143, %p144
      %s146 = ssub.s32 %s30, %s37
      %p147 = scmp.eq.s32.totalorder %s146, 0
      %s149 = sadd.s32 %s148, 1
      %s150 = scalar_select %p147, %s148, %s149
      %p153 = pneg %p147
      %p154 = scmp.eq.s32.totalorder %s22, 3
      %p155 = por %p153, %p154
      %p156 = scmp.ne.s32.totalorder %s148, %s151
      %p157 = scmp.eq.s32.totalorder %s22, 0
      %p158 = por %p156, %p157
      %p159 = scmp.ne.s32.totalorder %s148, %s151
      %p160 = scmp.eq.s32.totalorder %s27, 3
      %p161 = por %p159, %p160
      %p162 = scmp.ne.s32.totalorder %s151, %s152
      %p163 = scmp.eq.s32.totalorder %s27, 0
      %p164 = por %p162, %p163
      %p165 = scmp.ne.s32.totalorder %s151, %s152
      %p166 = scmp.eq.s32.totalorder %s28, 3
      %p167 = por %p165, %p166
      %p169 = scmp.ne.s32.totalorder %s152, %s168
      %p170 = scmp.eq.s32.totalorder %s28, 0
      %p171 = por %p169, %p170
      %s172 = ssub.s32 %s30, %s37
      %p173 = scmp.eq.s32.totalorder %s172, 0
      %s175 = sadd.s32 %s174, 1
      %s176 = scalar_select %p173, %s174, %s175
      %p179 = pneg %p173
      %p180 = scmp.eq.s32.totalorder %s22, 3
      %p181 = por %p179, %p180
      %p182 = scmp.ne.s32.totalorder %s174, %s177
      %p183 = scmp.eq.s32.totalorder %s22, 0
      %p184 = por %p182, %p183
      %p185 = scmp.ne.s32.totalorder %s174, %s177
      %p186 = scmp.eq.s32.totalorder %s27, 3
      %p187 = por %p185, %p186
      %p188 = scmp.ne.s32.totalorder %s177, %s178
      %p189 = scmp.eq.s32.totalorder %s27, 0
      %p190 = por %p188, %p189
      %p191 = scmp.ne.s32.totalorder %s177, %s178
      %p192 = scmp.eq.s32.totalorder %s28, 3
      %p193 = por %p191, %p192
      %p195 = scmp.ne.s32.totalorder %s178, %s194
      %p196 = scmp.eq.s32.totalorder %s28, 0
      %p197 = por %p195, %p196
      %s198 = ssub.s32 %s30, %s37
      %p199 = scmp.eq.s32.totalorder %s198, 0
      %s201 = sadd.s32 %s200, 1
      %s202 = scalar_select %p199, %s200, %s201
      %p205 = pneg %p199
      %p206 = scmp.eq.s32.totalorder %s22, 3
      %p207 = por %p205, %p206
      %p208 = scmp.ne.s32.totalorder %s200, %s203
      %p209 = scmp.eq.s32.totalorder %s22, 0
      %p210 = por %p208, %p209
      %p211 = scmp.ne.s32.totalorder %s200, %s203
      %p212 = scmp.eq.s32.totalorder %s27, 3
      %p213 = por %p211, %p212
      %p214 = scmp.ne.s32.totalorder %s203, %s204
      %p215 = scmp.eq.s32.totalorder %s27, 0
      %p216 = por %p214, %p215
      %p217 = scmp.ne.s32.totalorder %s203, %s204
      %p218 = scmp.eq.s32.totalorder %s28, 3
      %p219 = por %p217, %p218
      %p221 = scmp.ne.s32.totalorder %s204, %s220
      %p222 = scmp.eq.s32.totalorder %s28, 0
      %p223 = por %p221, %p222
      %s224 = ssub.s32 %s30, %s37
      %p225 = scmp.eq.s32.totalorder %s224, 0
      %s227 = sadd.s32 %s226, 1
      %s228 = scalar_select %p225, %s226, %s227
      %p231 = pneg %p225
      %p232 = scmp.eq.s32.totalorder %s22, 3
      %p233 = por %p231, %p232
      %p234 = scmp.ne.s32.totalorder %s226, %s229
      %p235 = scmp.eq.s32.totalorder %s22, 0
      %p236 = por %p234, %p235
      %p237 = scmp.ne.s32.totalorder %s226, %s229
      %p238 = scmp.eq.s32.totalorder %s27, 3
      %p239 = por %p237, %p238
      %p240 = scmp.ne.s32.totalorder %s229, %s230
      %p241 = scmp.eq.s32.totalorder %s27, 0
      %p242 = por %p240, %p241
      %p243 = scmp.ne.s32.totalorder %s229, %s230
      %p244 = scmp.eq.s32.totalorder %s28, 3
      %p245 = por %p243, %p244
      %p247 = scmp.ne.s32.totalorder %s230, %s246
      %p248 = scmp.eq.s32.totalorder %s28, 0
      %p249 = por %p247, %p248
      %s250 = ssub.s32 %s30, %s37
      %p251 = scmp.eq.s32.totalorder %s250, 0
      %s253 = sadd.s32 %s252, 1
      %s254 = scalar_select %p251, %s252, %s253
      %p257 = pneg %p251
      %p258 = scmp.eq.s32.totalorder %s22, 3
      %p259 = por %p257, %p258
      %p260 = scmp.ne.s32.totalorder %s252, %s255
      %p261 = scmp.eq.s32.totalorder %s22, 0
      %p262 = por %p260, %p261
      %p263 = scmp.ne.s32.totalorder %s252, %s255
      %p264 = scmp.eq.s32.totalorder %s27, 3
      %p265 = por %p263, %p264
      %p266 = scmp.ne.s32.totalorder %s255, %s256
      %p267 = scmp.eq.s32.totalorder %s27, 0
      %p268 = por %p266, %p267
      %p269 = scmp.ne.s32.totalorder %s255, %s256
      %p270 = scmp.eq.s32.totalorder %s28, 3
      %p271 = por %p269, %p270
      %p273 = scmp.ne.s32.totalorder %s256, %s272
      %p274 = scmp.eq.s32.totalorder %s28, 0
      %p275 = por %p273, %p274
      %s276 = ssub.s32 %s30, %s37
      %p277 = scmp.eq.s32.totalorder %s276, 0
      %s279 = sadd.s32 %s278, 1
      %s280 = scalar_select %p277, %s278, %s279
      %p283 = pneg %p277
      %p284 = scmp.eq.s32.totalorder %s22, 3
      %p285 = por %p283, %p284
      %p286 = scmp.ne.s32.totalorder %s278, %s281
      %p287 = scmp.eq.s32.totalorder %s22, 0
      %p288 = por %p286, %p287
      %p289 = scmp.ne.s32.totalorder %s278, %s281
      %p290 = scmp.eq.s32.totalorder %s27, 3
      %p291 = por %p289, %p290
      %p292 = scmp.ne.s32.totalorder %s281, %s282
      %p293 = scmp.eq.s32.totalorder %s27, 0
      %p294 = por %p292, %p293
      %p295 = scmp.ne.s32.totalorder %s281, %s282
      %p296 = scmp.eq.s32.totalorder %s28, 3
      %p297 = por %p295, %p296
      %p299 = scmp.ne.s32.totalorder %s282, %s298
      %p300 = scmp.eq.s32.totalorder %s28, 0
      %p301 = por %p299, %p300
      %s302 = ssub.s32 %s30, %s37
      %p303 = scmp.eq.s32.totalorder %s302, 0
      %s305 = sadd.s32 %s304, 1
      %s306 = scalar_select %p303, %s304, %s305
      %p309 = pneg %p303
      %p310 = scmp.eq.s32.totalorder %s22, 3
      %p311 = por %p309, %p310
      %p312 = scmp.ne.s32.totalorder %s304, %s307
      %p313 = scmp.eq.s32.totalorder %s22, 0
      %p314 = por %p312, %p313
      %p315 = scmp.ne.s32.totalorder %s304, %s307
      %p316 = scmp.eq.s32.totalorder %s27, 3
      %p317 = por %p315, %p316
      %p318 = scmp.ne.s32.totalorder %s307, %s308
      %p319 = scmp.eq.s32.totalorder %s27, 0
      %p320 = por %p318, %p319
      %p321 = scmp.ne.s32.totalorder %s307, %s308
      %p322 = scmp.eq.s32.totalorder %s28, 3
      %p323 = por %p321, %p322
      %p325 = scmp.ne.s32.totalorder %s308, %s324
      %p326 = scmp.eq.s32.totalorder %s28, 0
      %p327 = por %p325, %p326
      %s328 = ssub.s32 %s30, %s37
      %p329 = scmp.eq.s32.totalorder %s328, 0
      %s331 = sadd.s32 %s330, 1
      %s332 = scalar_select %p329, %s330, %s331
      %p335 = pneg %p329
      %p336 = scmp.eq.s32.totalorder %s22, 3
      %p337 = por %p335, %p336
      %p338 = scmp.ne.s32.totalorder %s330, %s333
      %p339 = scmp.eq.s32.totalorder %s22, 0
      %p340 = por %p338, %p339
      %p341 = scmp.ne.s32.totalorder %s330, %s333
      %p342 = scmp.eq.s32.totalorder %s27, 3
      %p343 = por %p341, %p342
      %p344 = scmp.ne.s32.totalorder %s333, %s334
      %p345 = scmp.eq.s32.totalorder %s27, 0
      %p346 = por %p344, %p345
      %p347 = scmp.ne.s32.totalorder %s333, %s334
      %p348 = scmp.eq.s32.totalorder %s28, 3
      %p349 = por %p347, %p348
      %p351 = scmp.ne.s32.totalorder %s334, %s350
      %p352 = scmp.eq.s32.totalorder %s28, 0
      %p353 = por %p351, %p352
      %s354 = ssub.s32 %s30, %s37
      %p355 = scmp.eq.s32.totalorder %s354, 0
      %s357 = sadd.s32 %s356, 1
      %s358 = scalar_select %p355, %s356, %s357
      %p361 = pneg %p355
      %p362 = scmp.eq.s32.totalorder %s22, 3
      %p363 = por %p361, %p362
      %p364 = scmp.ne.s32.totalorder %s356, %s359
      %p365 = scmp.eq.s32.totalorder %s22, 0
      %p366 = por %p364, %p365
      %p367 = scmp.ne.s32.totalorder %s356, %s359
      %p368 = scmp.eq.s32.totalorder %s27, 3
      %p369 = por %p367, %p368
      %p370 = scmp.ne.s32.totalorder %s359, %s360
      %p371 = scmp.eq.s32.totalorder %s27, 0
      %p372 = por %p370, %p371
      %p373 = scmp.ne.s32.totalorder %s359, %s360
      %p374 = scmp.eq.s32.totalorder %s28, 3
      %p375 = por %p373, %p374
      %p377 = scmp.ne.s32.totalorder %s360, %s376
      %p378 = scmp.eq.s32.totalorder %s28, 0
      %p379 = por %p377, %p378
      %s380 = ssub.s32 %s29, %s41
      %p381 = scmp.eq.s32.totalorder %s380, 0
      %s383 = sadd.s32 %s382, 1
      %s384 = scalar_select %p381, %s382, %s383
      %p387 = pneg %p381
      %p388 = scmp.eq.s32.totalorder %s22, 3
      %p389 = por %p387, %p388
      %p390 = scmp.ne.s32.totalorder %s382, %s385
      %p391 = scmp.eq.s32.totalorder %s22, 0
      %p392 = por %p390, %p391
      %p393 = scmp.ne.s32.totalorder %s382, %s385
      %p394 = scmp.eq.s32.totalorder %s27, 3
      %p395 = por %p393, %p394
      %p396 = scmp.ne.s32.totalorder %s385, %s386
      %p397 = scmp.eq.s32.totalorder %s27, 0
      %p398 = por %p396, %p397
      %p399 = scmp.ne.s32.totalorder %s385, %s386
      %p400 = scmp.eq.s32.totalorder %s28, 3
      %p401 = por %p399, %p400
      %p403 = scmp.ne.s32.totalorder %s386, %s402
      %p404 = scmp.eq.s32.totalorder %s28, 0
      %p405 = por %p403, %p404
      %p406 = scmp.le.s32.totalorder 1, %s22
      %p407 = scmp.lt.s32.totalorder %s22, 5
      %p408 = pnand %p406, %p407
      %p409 = pneg %p408
      // Predicated region
      $region9: #{tpu_custom_call.1} parent=5 // pred_check
        _
      $region10: #{tpu_custom_call.1} parent=5 // pred_check_branch
        %411 = sbr.rel (%p408) target = $region12
      $region11: #{tpu_custom_call.1} parent=5 // pred_region
        %s412 = ssub.s32 %s22, 1
      $region12: #{tpu_custom_call.1} parent=5 // pred_fallthru
        _
      %p413 = scmp.lt.s32.totalorder %s22, 4
      // Predicated region
      $region13: #{tpu_custom_call.1} parent=5 // pred_check
        %p414 = pneg %p413
      $region14: #{tpu_custom_call.1} parent=5 // pred_check_branch
        %416 = sbr.rel (%p414) target = $region16
      $region15: #{tpu_custom_call.1} parent=5 // pred_region
        // Predicated region
        $region17: #{tpu_custom_call.1} parent=15 // pred_check
          %p417 = pneg %p54
        $region18: #{tpu_custom_call.1} parent=15 // pred_check_branch
          %419 = sbr.rel (%p417) target = $region20
        $region19: #{tpu_custom_call.1} parent=15 // pred_region
          %p420 = scmp.lt.s32.totalorder %s29, 1
          %s421 = scalar_select %p420, %s29, 1
          %s422 = smul.addr %s421, 8
          %s423 = scalar_lea.vmem %s0, %s422
        $region20: #{tpu_custom_call.1} parent=15 // pred_fallthru
          _
        // Predicated region
        $region21: #{tpu_custom_call.1} parent=15 // pred_check
          %p424 = pneg %p80
        $region22: #{tpu_custom_call.1} parent=15 // pred_check_branch
          %426 = sbr.rel (%p424) target = $region24
        $region23: #{tpu_custom_call.1} parent=15 // pred_region
          %p427 = scmp.lt.s32.totalorder %s30, 1
          %s428 = scalar_select %p427, %s30, 1
          %s429 = scalar_lea.vmem %s1, %s428
        $region24: #{tpu_custom_call.1} parent=15 // pred_fallthru
          _
        // Predicated region
        $region25: #{tpu_custom_call.1} parent=15 // pred_check
          %p430 = pneg %p106
        $region26: #{tpu_custom_call.1} parent=15 // pred_check_branch
          %432 = sbr.rel (%p430) target = $region28
        $region27: #{tpu_custom_call.1} parent=15 // pred_region
          %p433 = scmp.lt.s32.totalorder %s30, 1
          %s434 = scalar_select %p433, %s30, 1
          %s435 = scalar_lea.vmem %s2, %s434
        $region28: #{tpu_custom_call.1} parent=15 // pred_fallthru
          _
        // Predicated region
        $region29: #{tpu_custom_call.1} parent=15 // pred_check
          %p436 = pneg %p132
        $region30: #{tpu_custom_call.1} parent=15 // pred_check_branch
          %438 = sbr.rel (%p436) target = $region32
        $region31: #{tpu_custom_call.1} parent=15 // pred_region
          %p439 = scmp.lt.s32.totalorder %s30, 1
          %s440 = scalar_select %p439, %s30, 1
          %s441 = smul.addr %s440, 4
          %s442 = smul.addr %s441, 8
          %s443 = scalar_lea.vmem %s3, %s442
        $region32: #{tpu_custom_call.1} parent=15 // pred_fallthru
          _
        // Predicated region
        $region33: #{tpu_custom_call.1} parent=15 // pred_check
          %p444 = pneg %p158
        $region34: #{tpu_custom_call.1} parent=15 // pred_check_branch
          %446 = sbr.rel (%p444) target = $region36
        $region35: #{tpu_custom_call.1} parent=15 // pred_region
          %p447 = scmp.lt.s32.totalorder %s30, 1
          %s448 = scalar_select %p447, %s30, 1
          %s449 = scalar_lea.vmem %s4, %s448
        $region36: #{tpu_custom_call.1} parent=15 // pred_fallthru
          _
        // Predicated region
        $region37: #{tpu_custom_call.1} parent=15 // pred_check
          %p450 = pneg %p184
        $region38: #{tpu_custom_call.1} parent=15 // pred_check_branch
          %452 = sbr.rel (%p450) target = $region40
        $region39: #{tpu_custom_call.1} parent=15 // pred_region
          %p453 = scmp.lt.s32.totalorder %s30, 1
          %s454 = scalar_select %p453, %s30, 1
          %s455 = smul.addr %s454, 4
          %s456 = smul.addr %s455, 8
          %s457 = scalar_lea.vmem %s5, %s456
        $region40: #{tpu_custom_call.1} parent=15 // pred_fallthru
          _
        // Predicated region
        $region41: #{tpu_custom_call.1} parent=15 // pred_check
          %p458 = pneg %p210
        $region42: #{tpu_custom_call.1} parent=15 // pred_check_branch
          %460 = sbr.rel (%p458) target = $region44
        $region43: #{tpu_custom_call.1} parent=15 // pred_region
          %p461 = scmp.lt.s32.totalorder %s30, 1
          %s462 = scalar_select %p461, %s30, 1
          %s463 = scalar_lea.vmem %s6, %s462
        $region44: #{tpu_custom_call.1} parent=15 // pred_fallthru
          _
        // Predicated region
        $region45: #{tpu_custom_call.1} parent=15 // pred_check
          %p464 = pneg %p236
        $region46: #{tpu_custom_call.1} parent=15 // pred_check_branch
          %466 = sbr.rel (%p464) target = $region48
        $region47: #{tpu_custom_call.1} parent=15 // pred_region
          %p467 = scmp.lt.s32.totalorder %s30, 1
          %s468 = scalar_select %p467, %s30, 1
          %s469 = scalar_lea.vmem %s7, %s468
        $region48: #{tpu_custom_call.1} parent=15 // pred_fallthru
          _
        // Predicated region
        $region49: #{tpu_custom_call.1} parent=15 // pred_check
          %p470 = pneg %p262
        $region50: #{tpu_custom_call.1} parent=15 // pred_check_branch
          %472 = sbr.rel (%p470) target = $region52
        $region51: #{tpu_custom_call.1} parent=15 // pred_region
          %p473 = scmp.lt.s32.totalorder %s30, 1
          %s474 = scalar_select %p473, %s30, 1
          %s475 = scalar_lea.vmem %s8, %s474
        $region52: #{tpu_custom_call.1} parent=15 // pred_fallthru
          _
        // Predicated region
        $region53: #{tpu_custom_call.1} parent=15 // pred_check
          %p476 = pneg %p288
        $region54: #{tpu_custom_call.1} parent=15 // pred_check_branch
          %478 = sbr.rel (%p476) target = $region56
        $region55: #{tpu_custom_call.1} parent=15 // pred_region
          %p479 = scmp.lt.s32.totalorder %s30, 1
          %s480 = scalar_select %p479, %s30, 1
          %s481 = smul.addr %s480, 4
          %s482 = smul.addr %s481, 8
          %s483 = scalar_lea.vmem %s9, %s482
        $region56: #{tpu_custom_call.1} parent=15 // pred_fallthru
          _
        // Predicated region
        $region57: #{tpu_custom_call.1} parent=15 // pred_check
          %p484 = pneg %p314
        $region58: #{tpu_custom_call.1} parent=15 // pred_check_branch
          %486 = sbr.rel (%p484) target = $region60
        $region59: #{tpu_custom_call.1} parent=15 // pred_region
          %p487 = scmp.lt.s32.totalorder %s30, 1
          %s488 = scalar_select %p487, %s30, 1
          %s489 = scalar_lea.vmem %s10, %s488
        $region60: #{tpu_custom_call.1} parent=15 // pred_fallthru
          _
        // Predicated region
        $region61: #{tpu_custom_call.1} parent=15 // pred_check
          %p490 = pneg %p340
        $region62: #{tpu_custom_call.1} parent=15 // pred_check_branch
          %492 = sbr.rel (%p490) target = $region64
        $region63: #{tpu_custom_call.1} parent=15 // pred_region
          %p493 = scmp.lt.s32.totalorder %s30, 1
          %s494 = scalar_select %p493, %s30, 1
          %s495 = smul.addr %s494, 16
          %s496 = smul.addr %s495, 8
          %s497 = scalar_lea.vmem %s11, %s496
        $region64: #{tpu_custom_call.1} parent=15 // pred_fallthru
          _
        // Predicated region
        $region65: #{tpu_custom_call.1} parent=15 // pred_check
          %p498 = pneg %p366
        $region66: #{tpu_custom_call.1} parent=15 // pred_check_branch
          %500 = sbr.rel (%p498) target = $region68
        $region67: #{tpu_custom_call.1} parent=15 // pred_region
          %p501 = scmp.lt.s32.totalorder %s30, 1
          %s502 = scalar_select %p501, %s30, 1
          %s503 = scalar_lea.vmem %s12, %s502
        $region68: #{tpu_custom_call.1} parent=15 // pred_fallthru
          _
      $region16: #{tpu_custom_call.1} parent=5 // pred_fallthru
        _
      %p504 = scmp.le.s32.totalorder 1, %s22
      %p505 = scmp.lt.s32.totalorder %s22, 5
      %p506 = pnand %p504, %p505
      %p507 = pneg %p506
      // Predicated region
      $region69: #{tpu_custom_call.1} parent=5 // pred_check
        _
      $region70: #{tpu_custom_call.1} parent=5 // pred_check_branch
        %509 = sbr.rel (%p506) target = $region72
      $region71: #{tpu_custom_call.1} parent=5 // pred_region
        %s510 = ssub.s32 %s22, 1
        %p511 = scmp.lt.s32.totalorder %s31, 1
        %s512 = scalar_select %p511, %s31, 1
        %s513 = smul.addr %s512, 8
        %s514 = scalar_lea.vmem %s0, %s513
        %p515 = pneg %p60
        %p516 = pneg %p57
        %p517 = scmp.lt.s32.totalorder %s32, 1
        %s518 = scalar_select %p517, %s32, 1
        %s519 = scalar_lea.vmem %s1, %s518
        %p520 = pneg %p86
        %p521 = pneg %p83
        %p522 = scmp.lt.s32.totalorder %s32, 1
        %s523 = scalar_select %p522, %s32, 1
        %s524 = scalar_lea.vmem %s2, %s523
        %p525 = pneg %p112
        %p526 = pneg %p109
        %p527 = scmp.lt.s32.totalorder %s32, 1
        %s528 = scalar_select %p527, %s32, 1
        %s529 = smul.addr %s528, 4
        %s530 = smul.addr %s529, 8
        %s531 = scalar_lea.vmem %s3, %s530
        %p532 = pneg %p138
        %p533 = pneg %p135
        %p534 = scmp.lt.s32.totalorder %s32, 1
        %s535 = scalar_select %p534, %s32, 1
        %s536 = scalar_lea.vmem %s4, %s535
        %p537 = pneg %p164
        %p538 = pneg %p161
        %p539 = scmp.lt.s32.totalorder %s32, 1
        %s540 = scalar_select %p539, %s32, 1
        %s541 = smul.addr %s540, 4
        %s542 = smul.addr %s541, 8
        %s543 = scalar_lea.vmem %s5, %s542
        %p544 = pneg %p190
        %p545 = pneg %p187
        %p546 = scmp.lt.s32.totalorder %s32, 1
        %s547 = scalar_select %p546, %s32, 1
        %s548 = scalar_lea.vmem %s6, %s547
        %p549 = pneg %p216
        %p550 = pneg %p213
        %p551 = scmp.lt.s32.totalorder %s32, 1
        %s552 = scalar_select %p551, %s32, 1
        %s553 = scalar_lea.vmem %s7, %s552
        %p554 = pneg %p242
        %p555 = pneg %p239
        %p556 = scmp.lt.s32.totalorder %s32, 1
        %s557 = scalar_select %p556, %s32, 1
        %s558 = scalar_lea.vmem %s8, %s557
        %p559 = pneg %p268
        %p560 = pneg %p265
        %p561 = scmp.lt.s32.totalorder %s32, 1
        %s562 = scalar_select %p561, %s32, 1
        %s563 = smul.addr %s562, 4
        %s564 = smul.addr %s563, 8
        %s565 = scalar_lea.vmem %s9, %s564
        %p566 = pneg %p294
        %p567 = pneg %p291
        %p568 = scmp.lt.s32.totalorder %s32, 1
        %s569 = scalar_select %p568, %s32, 1
        %s570 = scalar_lea.vmem %s10, %s569
        %p571 = pneg %p320
        %p572 = pneg %p317
        %p573 = scmp.lt.s32.totalorder %s32, 1
        %s574 = scalar_select %p573, %s32, 1
        %s575 = smul.addr %s574, 16
        %s576 = smul.addr %s575, 8
        %s577 = scalar_lea.vmem %s11, %s576
        %p578 = pneg %p346
        %p579 = pneg %p343
        %p580 = scmp.lt.s32.totalorder %s32, 1
        %s581 = scalar_select %p580, %s32, 1
        %s582 = scalar_lea.vmem %s12, %s581
        %p583 = pneg %p372
        %p584 = pneg %p369
        %p585 = pneg %p398
        %p586 = pneg %p395
        %s587 = sand.u32 %s385, 1
        %s588 = scalar_lea.sflag [#allocation3], %s587
        %s589 = sand.u32 %s385, 1
        %s590 = smul.addr %s589, 8
        %s591 = scalar_lea.vmem [#allocation2], %s590
        %p592 = scmp.lt.s32.totalorder %s31, 1
        %s593 = scalar_select %p592, %s31, 1
        %s594 = smul.addr %s593, 8
        %s595 = scalar_lea.vmem %s0, %s594
        %p596 = scmp.lt.s32.totalorder %s32, 1
        %s597 = scalar_select %p596, %s32, 1
        %s598 = scalar_lea.vmem %s1, %s597
        %p599 = scmp.lt.s32.totalorder %s32, 1
        %s600 = scalar_select %p599, %s32, 1
        %s601 = scalar_lea.vmem %s2, %s600
        %p602 = scmp.lt.s32.totalorder %s32, 1
        %s603 = scalar_select %p602, %s32, 1
        %s604 = smul.addr %s603, 4
        %s605 = smul.addr %s604, 8
        %s606 = scalar_lea.vmem %s3, %s605
        %p607 = scmp.lt.s32.totalorder %s32, 1
        %s608 = scalar_select %p607, %s32, 1
        %s609 = scalar_lea.vmem %s4, %s608
        %p610 = scmp.lt.s32.totalorder %s32, 1
        %s611 = scalar_select %p610, %s32, 1
        %s612 = smul.addr %s611, 4
        %s613 = smul.addr %s612, 8
        %s614 = scalar_lea.vmem %s5, %s613
        %p615 = scmp.lt.s32.totalorder %s32, 1
        %s616 = scalar_select %p615, %s32, 1
        %s617 = scalar_lea.vmem %s6, %s616
        %p618 = scmp.lt.s32.totalorder %s32, 1
        %s619 = scalar_select %p618, %s32, 1
        %s620 = scalar_lea.vmem %s7, %s619
        %p621 = scmp.lt.s32.totalorder %s32, 1
        %s622 = scalar_select %p621, %s32, 1
        %s623 = scalar_lea.vmem %s8, %s622
        %p624 = scmp.lt.s32.totalorder %s32, 1
        %s625 = scalar_select %p624, %s32, 1
        %s626 = smul.addr %s625, 4
        %s627 = smul.addr %s626, 8
        %s628 = scalar_lea.vmem %s9, %s627
        %p629 = scmp.lt.s32.totalorder %s32, 1
        %s630 = scalar_select %p629, %s32, 1
        %s631 = scalar_lea.vmem %s10, %s630
        %p632 = scmp.lt.s32.totalorder %s32, 1
        %s633 = scalar_select %p632, %s32, 1
        %s634 = smul.addr %s633, 16
        %s635 = smul.addr %s634, 8
        %s636 = scalar_lea.vmem %s11, %s635
        %p637 = scmp.lt.s32.totalorder %s32, 1
        %s638 = scalar_select %p637, %s32, 1
        %s639 = scalar_lea.vmem %s12, %s638
        %p640 = scmp.eq.s32.totalorder %s32, 0
        // Predicated region
        $region73: #{tpu_custom_call.1} parent=71 // pred_check
          %p641 = pneg %p640
        $region74: #{tpu_custom_call.1} parent=71 // pred_check_branch
          %643 = sbr.rel (%p641) target = $region76
        $region75: #{tpu_custom_call.1} parent=71 // pred_region
          %v644 = vld [vmem:[%s595] sm:$0xff]
          %vm645 = vcmask 261120
          %646 = vst.msk [vmem:[%s591] sm:$0xff] %vm645, %v644
        $region76: #{tpu_custom_call.1} parent=71 // pred_fallthru
          _
        %v647 = vld [vmem:[%s591] sm:$0xff]
        %v648 = vld [vmem:[%s598] sm:$0x1]
        %v649 = vld [vmem:[%s601] sm:$0x1]
        %vm650 = vcmask 261120
        %v651 = vsel %vm650, %v647, 0.0
        %652 = vadd.xlane.f32.xlu0 %v651
        %v653 = vpop.xlane.xlu0 %652
        %v654 = vrcp.pop 32.0
        %v655 = vmul.f32 32.0, %v654
        %v656 = vsub.f32 1.0, %v655
        %v657 = vmul.f32 %v654, %v656
        %v658 = vadd.f32 %v654, %v657
        %vm659 = vweird.f32 %v654
        %v660 = vsel %vm659, %v654, %v658
        %v661 = vmul.f32 %v653, %v660
        %v662 = vsub.f32 %v647, %v661
        %v663 = vmul.f32 %v662, %v662
        %v664 = vsel %vm650, %v663, 0.0
        %665 = vadd.xlane.f32.xlu0 %v664
        %v666 = vpop.xlane.xlu0 %665
        %v667 = vmul.f32 %v666, %v660
        %v668 = vadd.f32 %v667, 1e-05
        %v669 = vrsqrt.pop %v668
        %v670 = vmul.f32 %v669, %v668
        %v671 = vmul.f32 %v670, %v669
        %v672 = vmul.f32 0.5, %v671
        %v673 = vsub.f32 1.5, %v672
        %v674 = vmul.f32 %v669, %v673
        %vm675 = vweird.f32 %v668
        %vm676 = vweird.f32 %v669
        %vm677 = vmor %vm675, %vm676
        %v678 = vsel %vm677, %v669, %v674
        %v679 = vmul.f32 %v662, %v678
        %v681 = vperm.slane %v648, 0
        %v683 = vmul.f32 %v679, %v681
        %v685 = vperm.slane %v649, 0
        %v687 = vadd.f32 %v683, %v685
        %v688 = vld [vmem:[%s606] sm:$0xff]
        %v689 = vld [vmem:[%s606 + $0x8] sm:$0xff]
        %v690 = vld [vmem:[%s606 + $0x10] sm:$0xff]
        %v691 = vld [vmem:[%s606 + $0x18] sm:$0xff]
        %v692 = vld [vmem:[%s609] sm:$0x1]
        %v694 = vperm.slane %v692, 0
        %v697 = vsel %vm650, %v687, 0
        %699 = vmatpush.msra.mxu0 0.0
        %700 = vmatpush.msra.mxu0 0.0
        %701 = vmatpush.msra.mxu0 0.0
        %702 = vmatpush.msra.mxu0 0.0
        %703 = vmatpush.msra.mxu0 0.0
        %704 = vmatpush.msra.mxu0 0.0
        %705 = vmatpush.msra.mxu0 0.0
        %706 = vmatpush.msra.mxu0 0.0
        %707 = vmatpush.msra.mxu0 0.0
        %708 = vmatpush.msra.mxu0 0.0
        %709 = vmatpush.msra.mxu0 0.0
        %710 = vmatpush.msra.mxu0 0.0
        %711 = vmatpush.msra.mxu0 %v691
        %712 = vmatpush.msra.mxu0 %v690
        %713 = vmatpush.msra.mxu0 %v689
        %714 = vmatpush.msra.mxu0 %v688
        %715 = vmatmul.f32.gmra.mxu0 %v697
        %v716 = vpop.f32.mrf.mxu0
        %v717 = vadd.f32 %v694, %v716
        %718 = vdwg.mxu0
        %720 = vrot.lane.b32.xlu0 %v717, 120
        %v721 = vpop.permute.xlu0 %720
        %723 = vrot.lane.b32.xlu0 %v717, 112
        %v724 = vpop.permute.xlu0 %723
        %726 = vrot.lane.b32.xlu0 %v717, 104
        %v727 = vpop.permute.xlu0 %726
        %v729 = vrot.slane %v724, 4
        %vm730 = vcmask 1047556
        %v731 = vsel %vm730, %v729, %v717
        %v732 = vrot.slane %v717, 4
        %v733 = vsel %vm730, %v724, %v732
        %v735 = vunpack.c.l.s4 1983009808
        %v736 = vunpack.c.0.s8 %v735
        %v737 = vperm.slane %v731, %v736
        %v739 = vunpack.c.l.s4 1983009808
        %v740 = vunpack.c.0.s8 %v739
        %v741 = vperm.slane %v733, %v740
        %v742 = vrot.slane %v727, 4
        %v743 = vsel %vm730, %v742, %v721
        %v744 = vrot.slane %v721, 4
        %v745 = vsel %vm730, %v727, %v744
        %v747 = vunpack.c.l.s4 1983009808
        %v748 = vunpack.c.0.s8 %v747
        %v749 = vperm.slane %v743, %v748
        %v751 = vunpack.c.l.s4 1983009808
        %v752 = vunpack.c.0.s8 %v751
        %v753 = vperm.slane %v745, %v752
        %v754 = vrot.slane %v749, 4
        %v755 = vsel %vm730, %v754, %v737
        %v756 = vrot.slane %v737, 4
        %v757 = vsel %vm730, %v749, %v756
        %v759 = vunpack.c.l.s4 1934713408
        %v760 = vunpack.c.0.s8 %v759
        %v761 = vperm.slane %v755, %v760
        %v763 = vunpack.c.l.s4 1934713408
        %v764 = vunpack.c.0.s8 %v763
        %v765 = vperm.slane %v757, %v764
        %v766 = vrot.slane %v753, 4
        %v767 = vsel %vm730, %v766, %v741
        %v768 = vrot.slane %v741, 4
        %v769 = vsel %vm730, %v753, %v768
        %v771 = vunpack.c.l.s4 1934713408
        %v772 = vunpack.c.0.s8 %v771
        %v773 = vperm.slane %v767, %v772
        %v775 = vunpack.c.l.s4 1934713408
        %v776 = vunpack.c.0.s8 %v775
        %v777 = vperm.slane %v769, %v776
        %v778 = vrot.slane %v761, 4
        %v779 = vsel %vm730, 0.0, %v778
        %v780 = vrot.slane %v765, 4
        %v781 = vsel %vm730, 0.0, %v780
        %v782 = vrot.slane %v773, 4
        %v783 = vsel %vm730, 0.0, %v782
        %v784 = vrot.slane %v777, 4
        %v785 = vsel %vm730, 0.0, %v784
        %v786 = vsel %vm730, %v780, %v761
        %v788 = vunpack.c.l.s4 1983009808
        %v789 = vunpack.c.0.s8 %v788
        %v790 = vperm.slane %v786, %v789
        %v791 = vrot.slane %v781, 4
        %v792 = vsel %vm730, %v791, %v779
        %v794 = vunpack.c.l.s4 1983009808
        %v795 = vunpack.c.0.s8 %v794
        %v796 = vperm.slane %v792, %v795
        %v797 = vsel %vm730, %v784, %v773
        %v799 = vunpack.c.l.s4 1983009808
        %v800 = vunpack.c.0.s8 %v799
        %v801 = vperm.slane %v797, %v800
        %v802 = vrot.slane %v785, 4
        %v803 = vsel %vm730, %v802, %v783
        %v805 = vunpack.c.l.s4 1983009808
        %v806 = vunpack.c.0.s8 %v805
        %v807 = vperm.slane %v803, %v806
        %v808 = vrot.slane %v796, 4
        %v809 = vsel %vm730, %v808, %v790
        %v810 = vrot.slane %v790, 4
        %v811 = vsel %vm730, %v796, %v810
        %v813 = vunpack.c.l.s4 1934713408
        %v814 = vunpack.c.0.s8 %v813
        %v815 = vperm.slane %v809, %v814
        %v817 = vunpack.c.l.s4 1934713408
        %v818 = vunpack.c.0.s8 %v817
        %v819 = vperm.slane %v811, %v818
        %v820 = vrot.slane %v807, 4
        %v821 = vsel %vm730, %v820, %v801
        %v822 = vrot.slane %v801, 4
        %v823 = vsel %vm730, %v807, %v822
        %v825 = vunpack.c.l.s4 1934713408
        %v826 = vunpack.c.0.s8 %v825
        %v827 = vperm.slane %v821, %v826
        %v829 = vunpack.c.l.s4 1934713408
        %v830 = vunpack.c.0.s8 %v829
        %v831 = vperm.slane %v823, %v830
        %v832 = vrot.slane %v827, 4
        %v833 = vsel %vm730, %v832, %v815
        %v834 = vrot.slane %v815, 4
        %v835 = vsel %vm730, %v827, %v834
        %v836 = vrot.slane %v831, 4
        %v837 = vsel %vm730, %v836, %v819
        %v838 = vrot.slane %v819, 4
        %v839 = vsel %vm730, %v831, %v838
        %840 = vrot.lane.b32.xlu0 %v717, 96
        %v841 = vpop.permute.xlu0 %840
        %842 = vrot.lane.b32.xlu0 %v721, 96
        %v843 = vpop.permute.xlu0 %842
        %844 = vrot.lane.b32.xlu0 %v724, 96
        %v845 = vpop.permute.xlu0 %844
        %846 = vrot.lane.b32.xlu0 %v727, 96
        %v847 = vpop.permute.xlu0 %846
        %v852 = vrot.slane %v845, 4
        %v853 = vsel %vm730, %v852, %v841
        %v854 = vrot.slane %v841, 4
        %v855 = vsel %vm730, %v845, %v854
        %v857 = vunpack.c.l.s4 1983009808
        %v858 = vunpack.c.0.s8 %v857
        %v859 = vperm.slane %v853, %v858
        %v861 = vunpack.c.l.s4 1983009808
        %v862 = vunpack.c.0.s8 %v861
        %v863 = vperm.slane %v855, %v862
        %v864 = vrot.slane %v847, 4
        %v865 = vsel %vm730, %v864, %v843
        %v866 = vrot.slane %v843, 4
        %v867 = vsel %vm730, %v847, %v866
        %v869 = vunpack.c.l.s4 1983009808
        %v870 = vunpack.c.0.s8 %v869
        %v871 = vperm.slane %v865, %v870
        %v873 = vunpack.c.l.s4 1983009808
        %v874 = vunpack.c.0.s8 %v873
        %v875 = vperm.slane %v867, %v874
        %v876 = vrot.slane %v871, 4
        %v877 = vsel %vm730, %v876, %v859
        %v878 = vrot.slane %v859, 4
        %v879 = vsel %vm730, %v871, %v878
        %v881 = vunpack.c.l.s4 1934713408
        %v882 = vunpack.c.0.s8 %v881
        %v883 = vperm.slane %v877, %v882
        %v885 = vunpack.c.l.s4 1934713408
        %v886 = vunpack.c.0.s8 %v885
        %v887 = vperm.slane %v879, %v886
        %v888 = vrot.slane %v875, 4
        %v889 = vsel %vm730, %v888, %v863
        %v890 = vrot.slane %v863, 4
        %v891 = vsel %vm730, %v875, %v890
        %v893 = vunpack.c.l.s4 1934713408
        %v894 = vunpack.c.0.s8 %v893
        %v895 = vperm.slane %v889, %v894
        %v897 = vunpack.c.l.s4 1934713408
        %v898 = vunpack.c.0.s8 %v897
        %v899 = vperm.slane %v891, %v898
        %v900 = vrot.slane %v883, 4
        %v901 = vsel %vm730, 0.0, %v900
        %v902 = vrot.slane %v887, 4
        %v903 = vsel %vm730, 0.0, %v902
        %v904 = vrot.slane %v895, 4
        %v905 = vsel %vm730, 0.0, %v904
        %v906 = vrot.slane %v899, 4
        %v907 = vsel %vm730, 0.0, %v906
        %v908 = vsel %vm730, %v902, %v883
        %v910 = vunpack.c.l.s4 1983009808
        %v911 = vunpack.c.0.s8 %v910
        %v912 = vperm.slane %v908, %v911
        %v913 = vrot.slane %v903, 4
        %v914 = vsel %vm730, %v913, %v901
        %v916 = vunpack.c.l.s4 1983009808
        %v917 = vunpack.c.0.s8 %v916
        %v918 = vperm.slane %v914, %v917
        %v919 = vsel %vm730, %v906, %v895
        %v921 = vunpack.c.l.s4 1983009808
        %v922 = vunpack.c.0.s8 %v921
        %v923 = vperm.slane %v919, %v922
        %v924 = vrot.slane %v907, 4
        %v925 = vsel %vm730, %v924, %v905
        %v927 = vunpack.c.l.s4 1983009808
        %v928 = vunpack.c.0.s8 %v927
        %v929 = vperm.slane %v925, %v928
        %v930 = vrot.slane %v918, 4
        %v931 = vsel %vm730, %v930, %v912
        %v932 = vrot.slane %v912, 4
        %v933 = vsel %vm730, %v918, %v932
        %v935 = vunpack.c.l.s4 1934713408
        %v936 = vunpack.c.0.s8 %v935
        %v937 = vperm.slane %v931, %v936
        %v939 = vunpack.c.l.s4 1934713408
        %v940 = vunpack.c.0.s8 %v939
        %v941 = vperm.slane %v933, %v940
        %v942 = vrot.slane %v929, 4
        %v943 = vsel %vm730, %v942, %v923
        %v944 = vrot.slane %v923, 4
        %v945 = vsel %vm730, %v929, %v944
        %v947 = vunpack.c.l.s4 1934713408
        %v948 = vunpack.c.0.s8 %v947
        %v949 = vperm.slane %v943, %v948
        %v951 = vunpack.c.l.s4 1934713408
        %v952 = vunpack.c.0.s8 %v951
        %v953 = vperm.slane %v945, %v952
        %v954 = vrot.slane %v949, 4
        %v955 = vsel %vm730, %v954, %v937
        %v956 = vrot.slane %v937, 4
        %v957 = vsel %vm730, %v949, %v956
        %v958 = vrot.slane %v953, 4
        %v959 = vsel %vm730, %v958, %v941
        %v960 = vrot.slane %v941, 4
        %v961 = vsel %vm730, %v953, %v960
        %962 = vrot.lane.b32.xlu0 %v717, 64
        %v963 = vpop.permute.xlu0 %962
        %964 = vrot.lane.b32.xlu0 %v721, 64
        %v965 = vpop.permute.xlu0 %964
        %966 = vrot.lane.b32.xlu0 %v724, 64
        %v967 = vpop.permute.xlu0 %966
        %968 = vrot.lane.b32.xlu0 %v727, 64
        %v969 = vpop.permute.xlu0 %968
        %v974 = vrot.slane %v967, 4
        %v975 = vsel %vm730, %v974, %v963
        %v976 = vrot.slane %v963, 4
        %v977 = vsel %vm730, %v967, %v976
        %v979 = vunpack.c.l.s4 1983009808
        %v980 = vunpack.c.0.s8 %v979
        %v981 = vperm.slane %v975, %v980
        %v983 = vunpack.c.l.s4 1983009808
        %v984 = vunpack.c.0.s8 %v983
        %v985 = vperm.slane %v977, %v984
        %v986 = vrot.slane %v969, 4
        %v987 = vsel %vm730, %v986, %v965
        %v988 = vrot.slane %v965, 4
        %v989 = vsel %vm730, %v969, %v988
        %v991 = vunpack.c.l.s4 1983009808
        %v992 = vunpack.c.0.s8 %v991
        %v993 = vperm.slane %v987, %v992
        %v995 = vunpack.c.l.s4 1983009808
        %v996 = vunpack.c.0.s8 %v995
        %v997 = vperm.slane %v989, %v996
        %v998 = vrot.slane %v993, 4
        %v999 = vsel %vm730, %v998, %v981
        %v1000 = vrot.slane %v981, 4
        %v1001 = vsel %vm730, %v993, %v1000
        %v1003 = vunpack.c.l.s4 1934713408
        %v1004 = vunpack.c.0.s8 %v1003
        %v1005 = vperm.slane %v999, %v1004
        %v1007 = vunpack.c.l.s4 1934713408
        %v1008 = vunpack.c.0.s8 %v1007
        %v1009 = vperm.slane %v1001, %v1008
        %v1010 = vrot.slane %v997, 4
        %v1011 = vsel %vm730, %v1010, %v985
        %v1012 = vrot.slane %v985, 4
        %v1013 = vsel %vm730, %v997, %v1012
        %v1015 = vunpack.c.l.s4 1934713408
        %v1016 = vunpack.c.0.s8 %v1015
        %v1017 = vperm.slane %v1011, %v1016
        %v1019 = vunpack.c.l.s4 1934713408
        %v1020 = vunpack.c.0.s8 %v1019
        %v1021 = vperm.slane %v1013, %v1020
        %v1022 = vrot.slane %v1005, 4
        %v1023 = vsel %vm730, 0.0, %v1022
        %v1024 = vrot.slane %v1009, 4
        %v1025 = vsel %vm730, 0.0, %v1024
        %v1026 = vrot.slane %v1017, 4
        %v1027 = vsel %vm730, 0.0, %v1026
        %v1028 = vrot.slane %v1021, 4
        %v1029 = vsel %vm730, 0.0, %v1028
        %v1030 = vsel %vm730, %v1024, %v1005
        %v1032 = vunpack.c.l.s4 1983009808
        %v1033 = vunpack.c.0.s8 %v1032
        %v1034 = vperm.slane %v1030, %v1033
        %v1035 = vrot.slane %v1025, 4
        %v1036 = vsel %vm730, %v1035, %v1023
        %v1038 = vunpack.c.l.s4 1983009808
        %v1039 = vunpack.c.0.s8 %v1038
        %v1040 = vperm.slane %v1036, %v1039
        %v1041 = vsel %vm730, %v1028, %v1017
        %v1043 = vunpack.c.l.s4 1983009808
        %v1044 = vunpack.c.0.s8 %v1043
        %v1045 = vperm.slane %v1041, %v1044
        %v1046 = vrot.slane %v1029, 4
        %v1047 = vsel %vm730, %v1046, %v1027
        %v1049 = vunpack.c.l.s4 1983009808
        %v1050 = vunpack.c.0.s8 %v1049
        %v1051 = vperm.slane %v1047, %v1050
        %v1052 = vrot.slane %v1040, 4
        %v1053 = vsel %vm730, %v1052, %v1034
        %v1054 = vrot.slane %v1034, 4
        %v1055 = vsel %vm730, %v1040, %v1054
        %v1057 = vunpack.c.l.s4 1934713408
        %v1058 = vunpack.c.0.s8 %v1057
        %v1059 = vperm.slane %v1053, %v1058
        %v1061 = vunpack.c.l.s4 1934713408
        %v1062 = vunpack.c.0.s8 %v1061
        %v1063 = vperm.slane %v1055, %v1062
        %v1064 = vrot.slane %v1051, 4
        %v1065 = vsel %vm730, %v1064, %v1045
        %v1066 = vrot.slane %v1045, 4
        %v1067 = vsel %vm730, %v1051, %v1066
        %v1069 = vunpack.c.l.s4 1934713408
        %v1070 = vunpack.c.0.s8 %v1069
        %v1071 = vperm.slane %v1065, %v1070
        %v1073 = vunpack.c.l.s4 1934713408
        %v1074 = vunpack.c.0.s8 %v1073
        %v1075 = vperm.slane %v1067, %v1074
        %v1076 = vrot.slane %v1071, 4
        %v1077 = vsel %vm730, %v1076, %v1059
        %v1078 = vrot.slane %v1059, 4
        %v1079 = vsel %vm730, %v1071, %v1078
        %v1080 = vrot.slane %v1075, 4
        %v1081 = vsel %vm730, %v1080, %v1063
        %v1082 = vrot.slane %v1063, 4
        %v1083 = vsel %vm730, %v1075, %v1082
        %vm1084 = vcmask 64512
        %v1086 = vsel %vm1084, %v833, 0
        %v1089 = vsel %vm1084, %v955, 0
        %1091 = vmatpush.xpose.msra.mxu0 0.0
        %1092 = vmatpush.xpose.msra.mxu0 0.0
        %1093 = vmatpush.xpose.msra.mxu0 0.0
        %1094 = vmatpush.xpose.msra.mxu0 0.0
        %1095 = vmatpush.xpose.msra.mxu0 0.0
        %1096 = vmatpush.xpose.msra.mxu0 0.0
        %1097 = vmatpush.xpose.msra.mxu0 0.0
        %1098 = vmatpush.xpose.msra.mxu0 0.0
        %1099 = vmatpush.xpose.msra.mxu0 0.0
        %1100 = vmatpush.xpose.msra.mxu0 0.0
        %1101 = vmatpush.xpose.msra.mxu0 0.0
        %1102 = vmatpush.xpose.msra.mxu0 0.0
        %1103 = vmatpush.xpose.msra.mxu0 0.0
        %1104 = vmatpush.xpose.msra.mxu0 0.0
        %1105 = vmatpush.xpose.msra.mxu0 0.0
        %1106 = vmatpush.xpose.msra.mxu0 %v1089
        %1107 = vmatmul.f32.gmra.mxu0 %v1086
        %v1108 = vpop.f32.mrf.mxu0
        %v1109 = vadd.f32 0.0, %v1108
        %1110 = vdwg.mxu0
        %v1112 = vsel %vm1084, %v835, 0
        %v1115 = vsel %vm1084, %v957, 0
        %1117 = vmatpush.xpose.msra.mxu0 0.0
        %1118 = vmatpush.xpose.msra.mxu0 0.0
        %1119 = vmatpush.xpose.msra.mxu0 0.0
        %1120 = vmatpush.xpose.msra.mxu0 0.0
        %1121 = vmatpush.xpose.msra.mxu0 0.0
        %1122 = vmatpush.xpose.msra.mxu0 0.0
        %1123 = vmatpush.xpose.msra.mxu0 0.0
        %1124 = vmatpush.xpose.msra.mxu0 0.0
        %1125 = vmatpush.xpose.msra.mxu0 0.0
        %1126 = vmatpush.xpose.msra.mxu0 0.0
        %1127 = vmatpush.xpose.msra.mxu0 0.0
        %1128 = vmatpush.xpose.msra.mxu0 0.0
        %1129 = vmatpush.xpose.msra.mxu0 0.0
        %1130 = vmatpush.xpose.msra.mxu0 0.0
        %1131 = vmatpush.xpose.msra.mxu0 0.0
        %1132 = vmatpush.xpose.msra.mxu0 %v1115
        %1133 = vmatmul.f32.gmra.mxu0 %v1112
        %v1134 = vpop.f32.mrf.mxu0
        %v1135 = vadd.f32 0.0, %v1134
        %1136 = vdwg.mxu0
        %v1138 = vsel %vm1084, %v837, 0
        %v1141 = vsel %vm1084, %v959, 0
        %1143 = vmatpush.xpose.msra.mxu0 0.0
        %1144 = vmatpush.xpose.msra.mxu0 0.0
        %1145 = vmatpush.xpose.msra.mxu0 0.0
        %1146 = vmatpush.xpose.msra.mxu0 0.0
        %1147 = vmatpush.xpose.msra.mxu0 0.0
        %1148 = vmatpush.xpose.msra.mxu0 0.0
        %1149 = vmatpush.xpose.msra.mxu0 0.0
        %1150 = vmatpush.xpose.msra.mxu0 0.0
        %1151 = vmatpush.xpose.msra.mxu0 0.0
        %1152 = vmatpush.xpose.msra.mxu0 0.0
        %1153 = vmatpush.xpose.msra.mxu0 0.0
        %1154 = vmatpush.xpose.msra.mxu0 0.0
        %1155 = vmatpush.xpose.msra.mxu0 0.0
        %1156 = vmatpush.xpose.msra.mxu0 0.0
        %1157 = vmatpush.xpose.msra.mxu0 0.0
        %1158 = vmatpush.xpose.msra.mxu0 %v1141
        %1159 = vmatmul.f32.gmra.mxu0 %v1138
        %v1160 = vpop.f32.mrf.mxu0
        %v1161 = vadd.f32 0.0, %v1160
        %1162 = vdwg.mxu0
        %v1164 = vsel %vm1084, %v839, 0
        %v1167 = vsel %vm1084, %v961, 0
        %1169 = vmatpush.xpose.msra.mxu0 0.0
        %1170 = vmatpush.xpose.msra.mxu0 0.0
        %1171 = vmatpush.xpose.msra.mxu0 0.0
        %1172 = vmatpush.xpose.msra.mxu0 0.0
        %1173 = vmatpush.xpose.msra.mxu0 0.0
        %1174 = vmatpush.xpose.msra.mxu0 0.0
        %1175 = vmatpush.xpose.msra.mxu0 0.0
        %1176 = vmatpush.xpose.msra.mxu0 0.0
        %1177 = vmatpush.xpose.msra.mxu0 0.0
        %1178 = vmatpush.xpose.msra.mxu0 0.0
        %1179 = vmatpush.xpose.msra.mxu0 0.0
        %1180 = vmatpush.xpose.msra.mxu0 0.0
        %1181 = vmatpush.xpose.msra.mxu0 0.0
        %1182 = vmatpush.xpose.msra.mxu0 0.0
        %1183 = vmatpush.xpose.msra.mxu0 0.0
        %1184 = vmatpush.xpose.msra.mxu0 %v1167
        %1185 = vmatmul.f32.gmra.mxu0 %v1164
        %v1186 = vpop.f32.mrf.mxu0
        %v1187 = vadd.f32 0.0, %v1186
        %1188 = vdwg.mxu0
        %v1189 = vmul.f32 %v1109, 0.35355338
        %v1190 = vmul.f32 %v1135, 0.35355338
        %v1191 = vmul.f32 %v1161, 0.35355338
        %v1192 = vmul.f32 %v1187, 0.35355338
        %v1193 = vlaneseq
        %v1194 = vshrl.u32 %v1193, 7
        %v1195 = vlaneseq
        %v1196 = vand.u32 %v1195, 127
        %vm1197 = vcmp.ge.s32.totalorder %v1194, %v1196
        %v1198 = vsel %vm1197, 1, 0
        %vm1199 = vcmp.eq.s32.totalorder %v1198, 1
        %v1200 = vsel %vm1199, %v1189, -inf
        %v1201 = vsel %vm1199, %v1190, -inf
        %v1202 = vsel %vm1199, %v1191, -inf
        %v1203 = vsel %vm1199, %v1192, -inf
        %v1204 = vsel %vm1084, %v1200, -inf
        %1205 = vmax.xlane.f32.xlu0 %v1204
        %v1206 = vpop.xlane.xlu0 %1205
        %v1207 = vsel %vm1084, %v1201, -inf
        %1208 = vmax.xlane.f32.xlu0 %v1207
        %v1209 = vpop.xlane.xlu0 %1208
        %v1210 = vsel %vm1084, %v1202, -inf
        %1211 = vmax.xlane.f32.xlu0 %v1210
        %v1212 = vpop.xlane.xlu0 %1211
        %v1213 = vsel %vm1084, %v1203, -inf
        %1214 = vmax.xlane.f32.xlu0 %v1213
        %v1215 = vpop.xlane.xlu0 %1214
        %v1216 = vsub.f32 %v1200, %v1206
        %v1217 = vsub.f32 %v1201, %v1209
        %v1218 = vsub.f32 %v1202, %v1212
        %v1219 = vsub.f32 %v1203, %v1215
        %v1220 = vmul.f32 %v1216, 1.442695
        %v1221 = vpow.pop %v1220
        %v1222 = vmul.f32 %v1217, 1.442695
        %v1223 = vpow.pop %v1222
        %v1224 = vmul.f32 %v1218, 1.442695
        %v1225 = vpow.pop %v1224
        %v1226 = vmul.f32 %v1219, 1.442695
        %v1227 = vpow.pop %v1226
        %v1228 = vsel %vm1084, %v1221, 0.0
        %1229 = vadd.xlane.f32.xlu0 %v1228
        %v1230 = vpop.xlane.xlu0 %1229
        %v1231 = vsel %vm1084, %v1223, 0.0
        %1232 = vadd.xlane.f32.xlu0 %v1231
        %v1233 = vpop.xlane.xlu0 %1232
        %v1234 = vsel %vm1084, %v1225, 0.0
        %1235 = vadd.xlane.f32.xlu0 %v1234
        %v1236 = vpop.xlane.xlu0 %1235
        %v1237 = vsel %vm1084, %v1227, 0.0
        %1238 = vadd.xlane.f32.xlu0 %v1237
        %v1239 = vpop.xlane.xlu0 %1238
        %v1240 = vrcp.pop %v1230
        %v1241 = vmul.f32 %v1230, %v1240
        %v1242 = vsub.f32 1.0, %v1241
        %v1243 = vmul.f32 %v1240, %v1242
        %v1244 = vadd.f32 %v1240, %v1243
        %vm1245 = vweird.f32 %v1230
        %vm1246 = vweird.f32 %v1240
        %vm1247 = vmor %vm1245, %vm1246
        %v1248 = vsel %vm1247, %v1240, %v1244
        %v1249 = vand.u32 2147483647, %v1230
        %vm1250 = vcmp.eq.f32.partialorder %v1249, 8.507059e+37
        %v1251 = vand.u32 %v1230, 2147483648
        %v1252 = vor.u32 1.1754944e-38, %v1251
        %v1253 = vsel %vm1250, %v1252, %v1248
        %v1254 = vmul.f32 %v1221, %v1253
        %v1255 = vrcp.pop %v1233
        %v1256 = vmul.f32 %v1233, %v1255
        %v1257 = vsub.f32 1.0, %v1256
        %v1258 = vmul.f32 %v1255, %v1257
        %v1259 = vadd.f32 %v1255, %v1258
        %vm1260 = vweird.f32 %v1233
        %vm1261 = vweird.f32 %v1255
        %vm1262 = vmor %vm1260, %vm1261
        %v1263 = vsel %vm1262, %v1255, %v1259
        %v1264 = vand.u32 2147483647, %v1233
        %vm1265 = vcmp.eq.f32.partialorder %v1264, 8.507059e+37
        %v1266 = vand.u32 %v1233, 2147483648
        %v1267 = vor.u32 1.1754944e-38, %v1266
        %v1268 = vsel %vm1265, %v1267, %v1263
        %v1269 = vmul.f32 %v1223, %v1268
        %v1270 = vrcp.pop %v1236
        %v1271 = vmul.f32 %v1236, %v1270
        %v1272 = vsub.f32 1.0, %v1271
        %v1273 = vmul.f32 %v1270, %v1272
        %v1274 = vadd.f32 %v1270, %v1273
        %vm1275 = vweird.f32 %v1236
        %vm1276 = vweird.f32 %v1270
        %vm1277 = vmor %vm1275, %vm1276
        %v1278 = vsel %vm1277, %v1270, %v1274
        %v1279 = vand.u32 2147483647, %v1236
        %vm1280 = vcmp.eq.f32.partialorder %v1279, 8.507059e+37
        %v1281 = vand.u32 %v1236, 2147483648
        %v1282 = vor.u32 1.1754944e-38, %v1281
        %v1283 = vsel %vm1280, %v1282, %v1278
        %v1284 = vmul.f32 %v1225, %v1283
        %v1285 = vrcp.pop %v1239
        %v1286 = vmul.f32 %v1239, %v1285
        %v1287 = vsub.f32 1.0, %v1286
        %v1288 = vmul.f32 %v1285, %v1287
        %v1289 = vadd.f32 %v1285, %v1288
        %vm1290 = vweird.f32 %v1239
        %vm1291 = vweird.f32 %v1285
        %vm1292 = vmor %vm1290, %vm1291
        %v1293 = vsel %vm1292, %v1285, %v1289
        %v1294 = vand.u32 2147483647, %v1239
        %vm1295 = vcmp.eq.f32.partialorder %v1294, 8.507059e+37
        %v1296 = vand.u32 %v1239, 2147483648
        %v1297 = vor.u32 1.1754944e-38, %v1296
        %v1298 = vsel %vm1295, %v1297, %v1293
        %v1299 = vmul.f32 %v1227, %v1298
        %v1301 = vsel %vm1084, %v1254, 0
        %1303 = vmatpush.msra.mxu0 0.0
        %1304 = vmatpush.msra.mxu0 0.0
        %1305 = vmatpush.msra.mxu0 0.0
        %1306 = vmatpush.msra.mxu0 0.0
        %1307 = vmatpush.msra.mxu0 0.0
        %1308 = vmatpush.msra.mxu0 0.0
        %1309 = vmatpush.msra.mxu0 0.0
        %1310 = vmatpush.msra.mxu0 0.0
        %1311 = vmatpush.msra.mxu0 0.0
        %1312 = vmatpush.msra.mxu0 0.0
        %1313 = vmatpush.msra.mxu0 0.0
        %1314 = vmatpush.msra.mxu0 0.0
        %1315 = vmatpush.msra.mxu0 0.0
        %1316 = vmatpush.msra.mxu0 0.0
        %1317 = vmatpush.msra.mxu0 0.0
        %1318 = vmatpush.msra.mxu0 %v1077
        %1319 = vmatmul.f32.gmra.mxu0 %v1301
        %v1320 = vpop.f32.mrf.mxu0
        %v1321 = vadd.f32 0.0, %v1320
        %1322 = vdwg.mxu0
        %v1324 = vsel %vm1084, %v1269, 0
        %1326 = vmatpush.msra.mxu0 0.0
        %1327 = vmatpush.msra.mxu0 0.0
        %1328 = vmatpush.msra.mxu0 0.0
        %1329 = vmatpush.msra.mxu0 0.0
        %1330 = vmatpush.msra.mxu0 0.0
        %1331 = vmatpush.msra.mxu0 0.0
        %1332 = vmatpush.msra.mxu0 0.0
        %1333 = vmatpush.msra.mxu0 0.0
        %1334 = vmatpush.msra.mxu0 0.0
        %1335 = vmatpush.msra.mxu0 0.0
        %1336 = vmatpush.msra.mxu0 0.0
        %1337 = vmatpush.msra.mxu0 0.0
        %1338 = vmatpush.msra.mxu0 0.0
        %1339 = vmatpush.msra.mxu0 0.0
        %1340 = vmatpush.msra.mxu0 0.0
        %1341 = vmatpush.msra.mxu0 %v1079
        %1342 = vmatmul.f32.gmra.mxu0 %v1324
        %v1343 = vpop.f32.mrf.mxu0
        %v1344 = vadd.f32 0.0, %v1343
        %1345 = vdwg.mxu0
        %v1347 = vsel %vm1084, %v1284, 0
        %1349 = vmatpush.msra.mxu0 0.0
        %1350 = vmatpush.msra.mxu0 0.0
        %1351 = vmatpush.msra.mxu0 0.0
        %1352 = vmatpush.msra.mxu0 0.0
        %1353 = vmatpush.msra.mxu0 0.0
        %1354 = vmatpush.msra.mxu0 0.0
        %1355 = vmatpush.msra.mxu0 0.0
        %1356 = vmatpush.msra.mxu0 0.0
        %1357 = vmatpush.msra.mxu0 0.0
        %1358 = vmatpush.msra.mxu0 0.0
        %1359 = vmatpush.msra.mxu0 0.0
        %1360 = vmatpush.msra.mxu0 0.0
        %1361 = vmatpush.msra.mxu0 0.0
        %1362 = vmatpush.msra.mxu0 0.0
        %1363 = vmatpush.msra.mxu0 0.0
        %1364 = vmatpush.msra.mxu0 %v1081
        %1365 = vmatmul.f32.gmra.mxu0 %v1347
        %v1366 = vpop.f32.mrf.mxu0
        %v1367 = vadd.f32 0.0, %v1366
        %1368 = vdwg.mxu0
        %v1370 = vsel %vm1084, %v1299, 0
        %1372 = vmatpush.msra.mxu0 0.0
        %1373 = vmatpush.msra.mxu0 0.0
        %1374 = vmatpush.msra.mxu0 0.0
        %1375 = vmatpush.msra.mxu0 0.0
        %1376 = vmatpush.msra.mxu0 0.0
        %1377 = vmatpush.msra.mxu0 0.0
        %1378 = vmatpush.msra.mxu0 0.0
        %1379 = vmatpush.msra.mxu0 0.0
        %1380 = vmatpush.msra.mxu0 0.0
        %1381 = vmatpush.msra.mxu0 0.0
        %1382 = vmatpush.msra.mxu0 0.0
        %1383 = vmatpush.msra.mxu0 0.0
        %1384 = vmatpush.msra.mxu0 0.0
        %1385 = vmatpush.msra.mxu0 0.0
        %1386 = vmatpush.msra.mxu0 0.0
        %1387 = vmatpush.msra.mxu0 %v1083
        %1388 = vmatmul.f32.gmra.mxu0 %v1370
        %v1389 = vpop.f32.mrf.mxu0
        %v1390 = vadd.f32 0.0, %v1389
        %1391 = vdwg.mxu0
        %v1392 = vrot.slane %v1367, 4
        %v1393 = vsel %vm730, %v1392, %v1321
        %v1394 = vrot.slane %v1321, 4
        %v1395 = vsel %vm730, %v1367, %v1394
        %v1397 = vunpack.c.l.s4 1983009808
        %v1398 = vunpack.c.0.s8 %v1397
        %v1399 = vperm.slane %v1393, %v1398
        %v1401 = vunpack.c.l.s4 1983009808
        %v1402 = vunpack.c.0.s8 %v1401
        %v1403 = vperm.slane %v1395, %v1402
        %v1404 = vrot.slane %v1390, 4
        %v1405 = vsel %vm730, %v1404, %v1344
        %v1406 = vrot.slane %v1344, 4
        %v1407 = vsel %vm730, %v1390, %v1406
        %v1409 = vunpack.c.l.s4 1983009808
        %v1410 = vunpack.c.0.s8 %v1409
        %v1411 = vperm.slane %v1405, %v1410
        %v1413 = vunpack.c.l.s4 1983009808
        %v1414 = vunpack.c.0.s8 %v1413
        %v1415 = vperm.slane %v1407, %v1414
        %v1416 = vrot.slane %v1411, 4
        %v1417 = vsel %vm730, %v1416, %v1399
        %v1418 = vrot.slane %v1399, 4
        %v1419 = vsel %vm730, %v1411, %v1418
        %v1421 = vunpack.c.l.s4 1934713408
        %v1422 = vunpack.c.0.s8 %v1421
        %v1423 = vperm.slane %v1417, %v1422
        %v1425 = vunpack.c.l.s4 1934713408
        %v1426 = vunpack.c.0.s8 %v1425
        %v1427 = vperm.slane %v1419, %v1426
        %v1428 = vrot.slane %v1415, 4
        %v1429 = vsel %vm730, %v1428, %v1403
        %v1430 = vrot.slane %v1403, 4
        %v1431 = vsel %vm730, %v1415, %v1430
        %v1433 = vunpack.c.l.s4 1934713408
        %v1434 = vunpack.c.0.s8 %v1433
        %v1435 = vperm.slane %v1429, %v1434
        %v1437 = vunpack.c.l.s4 1934713408
        %v1438 = vunpack.c.0.s8 %v1437
        %v1439 = vperm.slane %v1431, %v1438
        %v1440 = vrot.slane %v1423, 4
        %v1441 = vsel %vm730, 0.0, %v1440
        %v1442 = vrot.slane %v1427, 4
        %v1443 = vsel %vm730, 0.0, %v1442
        %v1444 = vrot.slane %v1435, 4
        %v1445 = vsel %vm730, 0.0, %v1444
        %v1446 = vrot.slane %v1439, 4
        %v1447 = vsel %vm730, 0.0, %v1446
        %v1448 = vsel %vm730, %v1442, %v1423
        %v1450 = vunpack.c.l.s4 1983009808
        %v1451 = vunpack.c.0.s8 %v1450
        %v1452 = vperm.slane %v1448, %v1451
        %v1453 = vrot.slane %v1443, 4
        %v1454 = vsel %vm730, %v1453, %v1441
        %v1456 = vunpack.c.l.s4 1983009808
        %v1457 = vunpack.c.0.s8 %v1456
        %v1458 = vperm.slane %v1454, %v1457
        %v1459 = vsel %vm730, %v1446, %v1435
        %v1461 = vunpack.c.l.s4 1983009808
        %v1462 = vunpack.c.0.s8 %v1461
        %v1463 = vperm.slane %v1459, %v1462
        %v1464 = vrot.slane %v1447, 4
        %v1465 = vsel %vm730, %v1464, %v1445
        %v1467 = vunpack.c.l.s4 1983009808
        %v1468 = vunpack.c.0.s8 %v1467
        %v1469 = vperm.slane %v1465, %v1468
        %v1470 = vrot.slane %v1458, 4
        %v1471 = vsel %vm730, %v1470, %v1452
        %v1472 = vrot.slane %v1452, 4
        %v1473 = vsel %vm730, %v1458, %v1472
        %v1475 = vunpack.c.l.s4 1934713408
        %v1476 = vunpack.c.0.s8 %v1475
        %v1477 = vperm.slane %v1471, %v1476
        %v1479 = vunpack.c.l.s4 1934713408
        %v1480 = vunpack.c.0.s8 %v1479
        %v1481 = vperm.slane %v1473, %v1480
        %v1482 = vrot.slane %v1469, 4
        %v1483 = vsel %vm730, %v1482, %v1463
        %v1484 = vrot.slane %v1463, 4
        %v1485 = vsel %vm730, %v1469, %v1484
        %v1487 = vunpack.c.l.s4 1934713408
        %v1488 = vunpack.c.0.s8 %v1487
        %v1489 = vperm.slane %v1483, %v1488
        %v1491 = vunpack.c.l.s4 1934713408
        %v1492 = vunpack.c.0.s8 %v1491
        %v1493 = vperm.slane %v1485, %v1492
        %v1494 = vrot.slane %v1489, 4
        %v1495 = vsel %vm730, %v1494, %v1477
        %v1496 = vrot.slane %v1477, 4
        %v1497 = vsel %vm730, %v1489, %v1496
        %v1498 = vrot.slane %v1493, 4
        %v1499 = vsel %vm730, %v1498, %v1481
        %v1500 = vrot.slane %v1481, 4
        %v1501 = vsel %vm730, %v1493, %v1500
        %1503 = vrot.lane.b32.xlu0 %v1497, 8
        %v1504 = vpop.permute.xlu0 %1503
        %1507 = vrot.lane.b32.xlu0 %v1499, 16
        %v1508 = vpop.permute.xlu0 %1507
        %1511 = vrot.lane.b32.xlu0 %v1501, 24
        %v1512 = vpop.permute.xlu0 %1511
        %v1514 = vsel %vm1084, %v1495, %v1504
        %vm1515 = vcmask 130048
        %v1516 = vsel %vm1515, %v1514, %v1508
        %vm1517 = vcmask 195584
        %v1518 = vsel %vm1517, %v1516, %v1512
        %v1519 = vld [vmem:[%s614] sm:$0xff]
        %v1520 = vld [vmem:[%s614 + $0x8] sm:$0xff]
        %v1521 = vld [vmem:[%s614 + $0x10] sm:$0xff]
        %v1522 = vld [vmem:[%s614 + $0x18] sm:$0xff]
        %v1523 = vld [vmem:[%s617] sm:$0x1]
        %v1525 = vperm.slane %v1523, 0
        %v1528 = vsel %vm650, %v1518, 0
        %1530 = vmatpush.msra.mxu0 0.0
        %1531 = vmatpush.msra.mxu0 0.0
        %1532 = vmatpush.msra.mxu0 0.0
        %1533 = vmatpush.msra.mxu0 0.0
        %1534 = vmatpush.msra.mxu0 0.0
        %1535 = vmatpush.msra.mxu0 0.0
        %1536 = vmatpush.msra.mxu0 0.0
        %1537 = vmatpush.msra.mxu0 0.0
        %1538 = vmatpush.msra.mxu0 0.0
        %1539 = vmatpush.msra.mxu0 0.0
        %1540 = vmatpush.msra.mxu0 0.0
        %1541 = vmatpush.msra.mxu0 0.0
        %1542 = vmatpush.msra.mxu0 %v1522
        %1543 = vmatpush.msra.mxu0 %v1521
        %1544 = vmatpush.msra.mxu0 %v1520
        %1545 = vmatpush.msra.mxu0 %v1519
        %1546 = vmatmul.f32.gmra.mxu0 %v1528
        %v1547 = vpop.f32.mrf.mxu0
        %v1548 = vadd.f32 %v1525, %v1547
        %1549 = vdwg.mxu0
        %v1550 = vadd.f32 %v647, %v1548
        %v1551 = vld [vmem:[%s620] sm:$0x1]
        %v1552 = vld [vmem:[%s623] sm:$0x1]
        %v1553 = vsel %vm650, %v1550, 0.0
        %1554 = vadd.xlane.f32.xlu0 %v1553
        %v1555 = vpop.xlane.xlu0 %1554
        %v1556 = vmul.f32 %v1555, %v660
        %v1557 = vsub.f32 %v1550, %v1556
        %v1558 = vmul.f32 %v1557, %v1557
        %v1559 = vsel %vm650, %v1558, 0.0
        %1560 = vadd.xlane.f32.xlu0 %v1559
        %v1561 = vpop.xlane.xlu0 %1560
        %v1562 = vmul.f32 %v1561, %v660
        %v1563 = vadd.f32 %v1562, 1e-05
        %v1564 = vrsqrt.pop %v1563
        %v1565 = vmul.f32 %v1564, %v1563
        %v1566 = vmul.f32 %v1565, %v1564
        %v1567 = vmul.f32 0.5, %v1566
        %v1568 = vsub.f32 1.5, %v1567
        %v1569 = vmul.f32 %v1564, %v1568
        %vm1570 = vweird.f32 %v1563
        %vm1571 = vweird.f32 %v1564
        %vm1572 = vmor %vm1570, %vm1571
        %v1573 = vsel %vm1572, %v1564, %v1569
        %v1574 = vmul.f32 %v1557, %v1573
        %v1576 = vperm.slane %v1551, 0
        %v1578 = vmul.f32 %v1574, %v1576
        %v1580 = vperm.slane %v1552, 0
        %v1582 = vadd.f32 %v1578, %v1580
        %v1583 = vld [vmem:[%s628] sm:$0xff]
        %v1584 = vld [vmem:[%s628 + $0x8] sm:$0xff]
        %v1585 = vld [vmem:[%s628 + $0x10] sm:$0xff]
        %v1586 = vld [vmem:[%s628 + $0x18] sm:$0xff]
        %v1587 = vld [vmem:[%s631] sm:$0x1]
        %v1589 = vperm.slane %v1587, 0
        %v1592 = vsel %vm650, %v1582, 0
        %1594 = vmatpush.msra.mxu0 0.0
        %1595 = vmatpush.msra.mxu0 0.0
        %1596 = vmatpush.msra.mxu0 0.0
        %1597 = vmatpush.msra.mxu0 0.0
        %1598 = vmatpush.msra.mxu0 0.0
        %1599 = vmatpush.msra.mxu0 0.0
        %1600 = vmatpush.msra.mxu0 0.0
        %1601 = vmatpush.msra.mxu0 0.0
        %1602 = vmatpush.msra.mxu0 0.0
        %1603 = vmatpush.msra.mxu0 0.0
        %1604 = vmatpush.msra.mxu0 0.0
        %1605 = vmatpush.msra.mxu0 0.0
        %1606 = vmatpush.msra.mxu0 %v1586
        %1607 = vmatpush.msra.mxu0 %v1585
        %1608 = vmatpush.msra.mxu0 %v1584
        %1609 = vmatpush.msra.mxu0 %v1583
        %1610 = vmatmul.f32.gmra.mxu0 %v1592
        %v1611 = vpop.f32.mrf.mxu0
        %v1612 = vadd.f32 %v1589, %v1611
        %1613 = vdwg.mxu0
        %v1614 = vmul.f32 %v1612, 0.5
        %v1615 = vmul.f32 %v1612, 0.044715
        %v1616 = vmul.f32 %v1615, %v1612
        %v1617 = vmul.f32 %v1616, %v1612
        %v1618 = vadd.f32 %v1612, %v1617
        %v1619 = vmul.f32 %v1618, 0.7978846
        %v1620 = vtanh.pop %v1619
        %v1621 = vadd.f32 %v1620, 1.0
        %v1622 = vmul.f32 %v1614, %v1621
        %v1623 = vld [vmem:[%s636] sm:$0xff]
        %v1624 = vld [vmem:[%s636 + $0x8] sm:$0xff]
        %v1625 = vld [vmem:[%s636 + $0x10] sm:$0xff]
        %v1626 = vld [vmem:[%s636 + $0x18] sm:$0xff]
        %v1627 = vld [vmem:[%s636 + $0x20] sm:$0xff]
        %v1628 = vld [vmem:[%s636 + $0x28] sm:$0xff]
        %v1629 = vld [vmem:[%s636 + $0x30] sm:$0xff]
        %v1630 = vld [vmem:[%s636 + $0x38] sm:$0xff]
        %v1631 = vld [vmem:[%s636 + $0x40] sm:$0xff]
        %v1632 = vld [vmem:[%s636 + $0x48] sm:$0xff]
        %v1633 = vld [vmem:[%s636 + $0x50] sm:$0xff]
        %v1634 = vld [vmem:[%s636 + $0x58] sm:$0xff]
        %v1635 = vld [vmem:[%s636 + $0x60] sm:$0xff]
        %v1636 = vld [vmem:[%s636 + $0x68] sm:$0xff]
        %v1637 = vld [vmem:[%s636 + $0x70] sm:$0xff]
        %v1638 = vld [vmem:[%s636 + $0x78] sm:$0xff]
        %v1639 = vld [vmem:[%s639] sm:$0x1]
        %v1641 = vperm.slane %v1639, 0
        %1643 = vmatpush.msra.mxu0 %v1638
        %1644 = vmatpush.msra.mxu0 %v1637
        %1645 = vmatpush.msra.mxu0 %v1636
        %1646 = vmatpush.msra.mxu0 %v1635
        %1647 = vmatpush.msra.mxu0 %v1634
        %1648 = vmatpush.msra.mxu0 %v1633
        %1649 = vmatpush.msra.mxu0 %v1632
        %1650 = vmatpush.msra.mxu0 %v1631
        %1651 = vmatpush.msra.mxu0 %v1630
        %1652 = vmatpush.msra.mxu0 %v1629
        %1653 = vmatpush.msra.mxu0 %v1628
        %1654 = vmatpush.msra.mxu0 %v1627
        %1655 = vmatpush.msra.mxu0 %v1626
        %1656 = vmatpush.msra.mxu0 %v1625
        %1657 = vmatpush.msra.mxu0 %v1624
        %1658 = vmatpush.msra.mxu0 %v1623
        %1659 = vmatmul.f32.gmra.mxu0 %v1622
        %v1660 = vpop.f32.mrf.mxu0
        %v1661 = vadd.f32 %v1641, %v1660
        %1662 = vdwg.mxu0
        %v1663 = vadd.f32 %v1550, %v1661
        %1664 = vst.msk [vmem:[%s591] sm:$0xff] %vm650, %v1663
        %s1665 = sand.u32 %s385, 1
        %s1666 = scalar_lea.sflag [#allocation3], %s1665
        %s1667 = sand.u32 %s385, 1
        %s1668 = smul.addr %s1667, 8
        %s1669 = scalar_lea.vmem [#allocation2], %s1668
        // Predicated region
        $region77: #{tpu_custom_call.1} parent=71 // pred_check
          %p1670 = pneg %p395
        $region78: #{tpu_custom_call.1} parent=71 // pred_check_branch
          %1672 = sbr.rel (%p1670) target = $region80
        $region79: #{tpu_custom_call.1} parent=71 // pred_region
          %1674 = vsyncadd %s1666, 0
          %s1675 = smul.addr %s31, 8
          %s1676 = scalar_lea.hbm %s13, %s1675
          %s1678 = sshll.u32 %s1669, 4
          %s1679 = int_to_ptr.vmem [resolvable:$true] %s1678
          %s1680 = sshll.u32 %s1676, 4
          %s1681 = int_to_ptr.hbm [resolvable:$true] %s1680
          %1683 = dma.vmem_to_hbm [thread:$0]  %s1679, 128, %s1681, %s1666
        $region80: #{tpu_custom_call.1} parent=71 // pred_fallthru
          _
      $region72: #{tpu_custom_call.1} parent=5 // pred_fallthru
        _
      %p1684 = scmp.le.s32.totalorder 2, %s22
      // Predicated region
      $region81: #{tpu_custom_call.1} parent=5 // pred_check
        %p1685 = pneg %p1684
      $region82: #{tpu_custom_call.1} parent=5 // pred_check_branch
        %1687 = sbr.rel (%p1685) target = $region84
      $region83: #{tpu_custom_call.1} parent=5 // pred_region
        %s1688 = ssub.s32 %s22, 2
        // Predicated region
        $region85: #{tpu_custom_call.1} parent=83 // pred_check
          %p1689 = pneg %p401
        $region86: #{tpu_custom_call.1} parent=83 // pred_check_branch
          %1691 = sbr.rel (%p1689) target = $region88
        $region87: #{tpu_custom_call.1} parent=83 // pred_region
          %s1692 = sand.u32 %s386, 1
          %s1693 = scalar_lea.sflag [#allocation3], %s1692
          %s1694 = sand.u32 %s386, 1
          %s1695 = smul.addr %s1694, 8
          %s1696 = scalar_lea.vmem [#allocation2], %s1695
          %1698 = dma.done %s1693, 128
        $region88: #{tpu_custom_call.1} parent=83 // pred_fallthru
          _
      $region84: #{tpu_custom_call.1} parent=5 // pred_fallthru
        _
    $region6: #{tpu_custom_call.1} parent=1 // loop_footer
      %s26 = sadd.s32 1, %s22
    $region7: #{tpu_custom_call.1} parent=1 // loop_footer_branch
      %21 = sbr.rel target = $region3
    $region8: #{tpu_custom_call.1} parent=1 // loop_exit
      _
    %1699 = vsyncpa [#allocation3], 1
    %s1700 = scalar_lea.sflag [#allocation3], 1
    %1701 = vsyncpa %s1700, 1

</llo_original>
